<compile_context>
chip_gen: v6e
topology: v6e:2x2x1
jax: 0.10.0
libtpu: 0.0.40
codegen_flags: <defaults>
</compile_context>

<pallas_src>
import functools
import numpy as np
import jax
import jax.numpy as jnp
from jax import lax
from jax.experimental import pallas as pl
from jax.experimental.pallas import tpu as pltpu


def _round_up(v, m):
    return (v + m - 1) // m * m


# ---------------------------------------------------------------------------
# Deterministic Gabor weight construction (mirrors GFB.initialize semantics).
# ---------------------------------------------------------------------------
def gabor_kernel(frequency, sigma_x, sigma_y, theta=0.0, offset=0.0, ks=25):
    w = ks // 2
    grid_val = np.arange(-w, w + 1, dtype=np.float64)
    x, y = np.meshgrid(grid_val, grid_val)
    rotx = x * np.cos(theta) + y * np.sin(theta)
    roty = -x * np.sin(theta) + y * np.cos(theta)
    g = np.exp(-0.5 * (rotx ** 2 / sigma_x ** 2 + roty ** 2 / sigma_y ** 2))
    g /= 2.0 * np.pi * sigma_x * sigma_y
    g *= np.cos(2.0 * np.pi * frequency * rotx + offset)
    return g.astype(np.float32)


def make_gfb_weight(sf, theta, sigx, sigy, phase, color, in_channels, out_channels, ksize):
    # weight: (Cout, Cin, K, K), only channel `color[i]` non-zero (complex_color2=False path)
    w = np.zeros((out_channels, in_channels, ksize, ksize), dtype=np.float32)
    for i in range(out_channels):
        w[i, int(color[i])] = gabor_kernel(
            frequency=sf[i], sigma_x=sigx[i], sigma_y=sigy[i],
            theta=theta[i], offset=phase[i], ks=ksize)
    return w


# ---------------------------------------------------------------------------
# Shared layout bookkeeping for the fused (big-K) weight / folded input.
# ---------------------------------------------------------------------------
def _gfb_layout(cin, simple_channels, complex_channels, ksize, stride):
    cout = simple_channels + complex_channels
    cout_p = _round_up(cout, 128)
    kc = -(-ksize // stride)                      # coarse kernel size after the fold
    cf = stride * stride * cin                    # folded channel count (space-to-depth)
    kcf_p = _round_up(kc * cf, 128)               # lane-dense dx-folded channel count
    kb = kc * kcf_p                               # matmul contraction length
    aligned_split = (simple_channels % 128 == 0 and simple_channels > 0
                     and complex_channels > 0)
    if aligned_split:
        # q1 columns packed for complex channels only; epilogue splits into two
        # lane-aligned slabs (relu | sqrt-combine).  cout_p - simple == round_up(complex,128).
        n_total = cout_p + _round_up(complex_channels, 128)
        q1_col0 = cout_p
    else:
        # general path: q1 channel-aligned at cout_p + channel, iota/where epilogue
        n_total = 2 * cout_p
        q1_col0 = cout_p + simple_channels
    return dict(cout=cout, cout_p=cout_p, kc=kc, cf=cf, kcf_p=kcf_p, kb=kb,
                aligned_split=aligned_split, n_total=n_total, q1_col0=q1_col0)


# ---------------------------------------------------------------------------
# Host-side weight fusion into one (kb, n_total) big-K matrix.
#   K index = dy*kcf_p + dx*cf + (py*stride+px)*cin + ci  <->  tap (dy*s+py, dx*s+px, ci)
# ---------------------------------------------------------------------------
def fuse_gabor_weights(w_q0, w_q1, *, simple_channels, stride):
    w0 = np.asarray(w_q0, dtype=np.float32)
    w1 = np.asarray(w_q1, dtype=np.float32)
    cout, cin, ksize, _ = w0.shape
    complex_channels = cout - simple_channels
    L = _gfb_layout(cin, simple_channels, complex_channels, ksize, stride)
    wf = np.zeros((L["kb"], L["n_total"]), dtype=np.float32)
    for dy in range(L["kc"]):
        for dx in range(L["kc"]):
            for py in range(stride):
                ky = dy * stride + py
                if ky >= ksize:
                    continue                      # zero-extended kernel rows
                for px in range(stride):
                    kx = dx * stride + px
                    if kx >= ksize:
                        continue                  # zero-extended kernel cols
                    r0 = dy * L["kcf_p"] + dx * L["cf"] + (py * stride + px) * cin
                    wf[r0:r0 + cin, :cout] = w0[:, :, ky, kx].T
                    if complex_channels > 0:
                        wf[r0:r0 + cin, L["q1_col0"]:L["q1_col0"] + complex_channels] = \
                            w1[simple_channels:, :, ky, kx].T
    return jnp.asarray(wf)


# ---------------------------------------------------------------------------
# Wrapper-side layout prep: pad + space-to-depth fold + dx fold into channels.
#   xg[b, Y, X, dx*cf + (py*s+px)*cin + ci] = x_pad[b, ci, (Y+dx? no: Y)*s+py, (X+dx)*s+px]
#   (lane axis padded to kcf_p so the in-kernel dy-concat stays 128-aligned)
# ---------------------------------------------------------------------------
def _fold_input(x, *, ksize, stride, oh_p, ow, kcf_p):
    b, cin, h, w = x.shape
    pad = ksize // 2
    kc = -(-ksize // stride)
    cf = stride * stride * cin
    yc = oh_p - 1 + kc
    xc = ow - 1 + kc
    hp, wp = yc * stride, xc * stride
    xp = jnp.pad(x, ((0, 0), (0, 0),
                     (pad, max(0, hp - pad - h)),
                     (pad, max(0, wp - pad - w))))
    xp = xp[:, :, :hp, :wp]
    xnhwc = xp.transpose(0, 2, 3, 1)                                   # (B, hp, wp, Cin)
    xf = xnhwc.reshape(b, yc, stride, xc, stride, cin)
    xf = xf.transpose(0, 1, 3, 2, 4, 5).reshape(b, yc, xc, cf)         # (B, Yc, Xc, cf)
    # dx fold (column kernel offsets -> channels): (B, Yc, OW, kc*cf)
    slabs = [xf[:, :, dx:dx + ow, :] for dx in range(kc)]
    xg = slabs[0] if kc == 1 else jnp.concatenate(slabs, axis=3)
    if kcf_p > kc * cf:
        xg = jnp.pad(xg, ((0, 0), (0, 0), (0, 0), (0, kcf_p - kc * cf)))
    return xg                                                          # (B, Yc, OW, kcf_p)


# ---------------------------------------------------------------------------
# Per-generation sizing helpers.
# ---------------------------------------------------------------------------
def _vmem_capacity_bytes():
    try:
        info = pltpu.get_tpu_info()
        for attr in ("vmem_capacity_bytes", "vmem_size_bytes", "vmem_bytes"):
            v = getattr(info, attr, None)
            if v:
                return int(v)
    except Exception:
        pass
    return 64 * 1024 * 1024            # conservative default (v7x per-TC budget)


def _num_tensorcores():
    try:
        kind = jax.devices()[0].device_kind.lower()
    except Exception:
        return 1
    return 2 if ("v7" in kind or "7x" in kind) else 1


# ---------------------------------------------------------------------------
# Pallas kernel: in-VMEM dy-fold (lane-aligned concat) -> single big-K matmul
# -> fused simple/complex epilogue.
# ---------------------------------------------------------------------------
def vone_kernel(xg_ref, wf_ref, o_ref, *, toh, ow, kc, kcf_p, cout_p,
                simple_channels, k_exc, aligned_split):
    m = toh * ow
    row0 = pl.program_id(1) * toh
    if toh % 8 == 0:
        row0 = pl.multiple_of(row0, 8)
    # dy slices are along the *major* row axis of the resident (Yc, OW, kcf_p)
    # image -> tile-granular at any offset; each slab is lane-dense (kcf_p % 128 == 0)
    # so the concat along lanes needs no relayout.
    slabs = [xg_ref[0, pl.ds(row0 + dy, toh), :, :].reshape(m, kcf_p)
             for dy in range(kc)]
    lhs = slabs[0] if kc == 1 else jnp.concatenate(slabs, axis=1)      # (m, kc*kcf_p)
    acc = jnp.dot(lhs, wf_ref[...], preferred_element_type=jnp.float32)
    ke = jnp.float32(k_exc)
    inv_sqrt2 = jnp.float32(1.0 / np.sqrt(2.0))
    s0 = acc[:, :cout_p]            # q0 response, all channels (128-aligned slab)
    s1 = acc[:, cout_p:]            # q1 response (layout depends on aligned_split)
    if aligned_split:
        simple = jnp.maximum(s0[:, :simple_channels], 0.0)
        c0 = s0[:, simple_channels:]                                   # width == s1 width
        cplx = jnp.sqrt(c0 * c0 + s1 * s1) * inv_sqrt2
        o_ref[0, :, :simple_channels] = (ke * simple).astype(o_ref.dtype)
        o_ref[0, :, simple_channels:] = (ke * cplx).astype(o_ref.dtype)
    else:
        ch = lax.broadcasted_iota(jnp.int32, s0.shape, 1)
        simple = jnp.maximum(s0, 0.0)
        cplx = jnp.sqrt(s0 * s0 + s1 * s1) * inv_sqrt2
        out = ke * jnp.where(ch < simple_channels, simple, cplx)
        o_ref[0, :, :] = out.astype(o_ref.dtype)


def vone_block_forward(x, wf, *, simple_channels, complex_channels, ksize, stride,
                       k_exc, toh=None, compute_dtype=jnp.float32,
                       weight_buffer_count=1, nchw_output=True):
    """x: (B, Cin, H, W) NCHW f32; wf: fused weight from fuse_gabor_weights.
    Returns (B, Cout, OH, OW) (or NHWC if nchw_output=False)."""
    b, cin, h, w = x.shape
    L = _gfb_layout(cin, simple_channels, complex_channels, ksize, stride)
    pad = ksize // 2
    oh = (h + 2 * pad - ksize) // stride + 1
    ow = (w + 2 * pad - ksize) // stride + 1

    # ---- per-generation VMEM budgeting & row-tile selection ----
    dsize = jnp.dtype(compute_dtype).itemsize
    vmem_cap = _vmem_capacity_bytes()
    n_cores = _num_tensorcores()
    vmem_limit = min(int(vmem_cap * 3 // 4), 112 * 1024 * 1024)
    usable = int(vmem_limit * 0.8)
    wf_copies = 1 if weight_buffer_count == 1 else 2
    fixed = (L["kb"] * L["n_total"] * dsize * wf_copies            # resident fused weight
             + 2 * (oh + L["kc"]) * ow * L["kcf_p"] * dsize)        # dx-folded image (2 bufs)
    per_row = (ow * (L["kb"] * dsize                                # big-K LHS slab
                     + L["n_total"] * 4                             # f32 matmul result
                     + 2 * L["cout_p"] * 4)                         # double-buffered output
               + 2 * ow * L["kcf_p"] * dsize)                       # extra xg rows from oh_p pad
    toh_cap = max(1, (usable - fixed) // per_row) if usable > fixed else 8
    if toh is None:
        toh = int(toh_cap)
    toh = max(1, min(toh, oh))
    if ow % 8 != 0:
        toh = max(8, ((toh + 7) // 8) * 8)          # keep m_tile a multiple of 8 sublanes
    # v7x: 2 TensorCores -> prefer an even number of parallel grid blocks
    step = 8 if ow % 8 != 0 else 1
    if n_cores == 2 and b % 2 == 1 and oh > 1:
        t = toh
        while t > step and (b * (-(-oh // t))) % 2 == 1:
            t -= step
        if (b * (-(-oh // t))) % 2 == 0:
            toh = t
    row_blocks = -(-oh // toh)
    oh_p = row_blocks * toh
    m_tile = toh * ow

    xg = _fold_input(x, ksize=ksize, stride=stride, oh_p=oh_p, ow=ow,
                     kcf_p=L["kcf_p"]).astype(compute_dtype)
    yc = xg.shape[1]
    wf = wf.astype(compute_dtype)
    assert wf.shape == (L["kb"], L["n_total"]), (wf.shape, L)

    kernel = functools.partial(
        vone_kernel, toh=toh, ow=ow, kc=L["kc"], kcf_p=L["kcf_p"],
        cout_p=L["cout_p"], simple_channels=simple_channels,
        k_exc=float(k_exc), aligned_split=L["aligned_split"])

    wf_spec_kwargs = {}
    if weight_buffer_count is not None:
        # constant index_map -> loaded once & resident; single-buffer it to reclaim VMEM
        wf_spec_kwargs["pipeline_mode"] = pl.Buffered(int(weight_buffer_count))

    out_flat = pl.pallas_call(
        kernel,
        out_shape=jax.ShapeDtypeStruct((b, oh_p * ow, L["cout_p"]), jnp.float32),
        grid_spec=pltpu.PrefetchScalarGridSpec(
            num_scalar_prefetch=0,
            grid=(b, row_blocks),
            in_specs=[
                # dx-folded image, full spatial extent per batch element; block index
                # only changes with bi, so it stays resident across row blocks.
                pl.BlockSpec((1, yc, ow, L["kcf_p"]), lambda bi, ri: (bi, 0, 0, 0)),
                # Fused Gabor weights: constant index_map -> loaded once, resident.
                pl.BlockSpec((L["kb"], L["n_total"]), lambda bi, ri: (0, 0),
                             **wf_spec_kwargs),
            ],
            out_specs=pl.BlockSpec((1, m_tile, L["cout_p"]), lambda bi, ri: (bi, ri, 0)),
        ),
        compiler_params=pltpu.CompilerParams(
            dimension_semantics=("parallel", "parallel"),
            vmem_limit_bytes=int(vmem_limit),
        ),
    )(xg, wf)

    # (B, OHp*OW, Cout_p) -> crop padding
    out = out_flat.reshape(b, oh_p, ow, L["cout_p"])[:, :oh, :, :L["cout"]]
    if nchw_output:
        # TODO(synk): skip this HBM transpose if the downstream consumer accepts NHWC.
        out = out.transpose(0, 3, 1, 2)
    return out


# ---------------------------------------------------------------------------
# Pure-JAX reference (mirrors the PyTorch forward with noise_mode=None).
# ---------------------------------------------------------------------------
def vone_block_reference(x, w_q0, w_q1, *, simple_channels, k_exc, stride):
    pad = w_q0.shape[-1] // 2
    dn = ("NCHW", "OIHW", "NCHW")
    s_q0 = lax.conv_general_dilated(x, w_q0, (stride, stride), [(pad, pad), (pad, pad)],
                                    dimension_numbers=dn, precision=lax.Precision.HIGHEST)
    s_q1 = lax.conv_general_dilated(x, w_q1, (stride, stride), [(pad, pad), (pad, pad)],
                                    dimension_numbers=dn, precision=lax.Precision.HIGHEST)
    c = jnp.sqrt(s_q0[:, simple_channels:] ** 2 + s_q1[:, simple_channels:] ** 2) / np.sqrt(2.0)
    s = jnp.maximum(s_q0[:, :simple_channels], 0.0)
    return k_exc * jnp.concatenate([s, c], axis=1)
    # noise_f is the identity for noise_mode=None.
    # TODO(synk): 'neuronal'/'gaussian' noise modes use torch Normal rsample (training-time RNG); not implemented.


if __name__ == "__main__":
    def run_case(tag, *, B, Cin, H, W, ksize, stride, simple_channels,
                 complex_channels, k_exc, seed):
        out_channels = simple_channels + complex_channels
        rs = np.random.RandomState(seed)
        sf = rs.uniform(0.05, 0.25, out_channels)
        theta = rs.uniform(0.0, np.pi, out_channels)
        sigx = rs.uniform(2.0, 6.0, out_channels)
        sigy = rs.uniform(2.0, 6.0, out_channels)
        phase = rs.uniform(0.0, 2.0 * np.pi, out_channels)
        color = rs.randint(0, Cin, out_channels)

        w_q0 = jnp.asarray(make_gfb_weight(sf, theta, sigx, sigy, phase, color,
                                           Cin, out_channels, ksize))
        w_q1 = jnp.asarray(make_gfb_weight(sf, theta, sigx, sigy, phase + np.pi / 2, color,
                                           Cin, out_channels, ksize))
        wf = fuse_gabor_weights(w_q0, w_q1, simple_channels=simple_channels, stride=stride)
        x = jax.random.normal(jax.random.PRNGKey(0), (B, Cin, H, W), dtype=jnp.float32)

        out, last_err = None, None
        # Try single-buffered resident weights first; fall back to the default
        # double-buffered spec if this jax build rejects pl.Buffered(1).
        for wbc in (1, None):
            try:
                fwd = jax.jit(functools.partial(
                    vone_block_forward, simple_channels=simple_channels,
                    complex_channels=complex_channels, ksize=ksize, stride=stride,
                    k_exc=k_exc, weight_buffer_count=wbc))
                out = jax.block_until_ready(fwd(x, wf))
                break
            except Exception as e:           # pragma: no cover - fallback path
                last_err = e
        if out is None:
            raise last_err

        ref = jax.block_until_ready(
            vone_block_reference(x, w_q0, w_q1, simple_channels=simple_channels,
                                 k_exc=k_exc, stride=stride))
        pad = ksize // 2
        oh = (H + 2 * pad - ksize) // stride + 1
        ow = (W + 2 * pad - ksize) // stride + 1
        assert out.shape == (B, out_channels, oh, ow), (tag, out.shape)
        np.testing.assert_allclose(np.asarray(out), np.asarray(ref),
                                   rtol=3e-4, atol=3e-3, err_msg=tag)

    # Module-default channel split (128 simple + 128 complex) at a small spatial size
    # -> exercises the shrunk-N, lane-aligned split epilogue.
    run_case("aligned", B=2, Cin=3, H=32, W=32, ksize=7, stride=4,
             simple_channels=128, complex_channels=128, k_exc=25.0, seed=0)
    # Unaligned channel split -> exercises the general (iota/where) epilogue path.
    run_case("general", B=1, Cin=3, H=32, W=32, ksize=7, stride=4,
             simple_channels=64, complex_channels=64, k_exc=25.0, seed=1)
    print("KERNEL_OK")
</pallas_src>

<mosaic_0001>
module attributes {stable_mosaic.version = 11 : i64} {
  func.func @vone_kernel(%arg0: i32, %arg1: i32, %arg2: memref<1x9x8x128xf32, #tpu.memory_space<vmem>>, %arg3: memref<256x384xf32, #tpu.memory_space<vmem>>, %arg4: memref<1x64x256xf32, #tpu.memory_space<vmem>>) attributes {dimension_semantics = [#tpu.dimension_semantics<parallel>, #tpu.dimension_semantics<parallel>], iteration_bounds = array<i64: 2, 1>, scalar_prefetch = 0 : i64, scratch_operands = 0 : i64, tpu.core_type = #tpu.core_type<tc>, window_params = [{transform_indices = @transform_0, window_bounds = array<i64: 1, 9, 8, 128>}, {pipeline_mode = #tpu.pipeline_mode<synchronous>, transform_indices = @transform_1, window_bounds = array<i64: 256, 384>}, {transform_indices = @transform_2, window_bounds = array<i64: 1, 64, 256>}]} {
    %c8_i32 = arith.constant 8 : i32
    %0 = arith.muli %arg1, %c8_i32 : i32
    %1 = tpu.assume_multiple %0, 8 : i32
    %c0_i32 = arith.constant 0 : i32
    %2 = arith.addi %1, %c0_i32 : i32
    %c0 = arith.constant 0 : index
    %3 = arith.index_cast %2 : i32 to index
    %c0_0 = arith.constant 0 : index
    %c0_1 = arith.constant 0 : index
    %4 = vector.load %arg2[%c0, %3, %c0_0, %c0_1] : memref<1x9x8x128xf32, #tpu.memory_space<vmem>>, vector<1x8x8x128xf32>
    %5 = vector.shape_cast %4 : vector<1x8x8x128xf32> to vector<8x8x128xf32>
    %6 = vector.shape_cast %5 : vector<8x8x128xf32> to vector<64x128xf32>
    %c1_i32 = arith.constant 1 : i32
    %7 = arith.addi %1, %c1_i32 : i32
    %c0_2 = arith.constant 0 : index
    %8 = arith.index_cast %7 : i32 to index
    %c0_3 = arith.constant 0 : index
    %c0_4 = arith.constant 0 : index
    %9 = vector.load %arg2[%c0_2, %8, %c0_3, %c0_4] : memref<1x9x8x128xf32, #tpu.memory_space<vmem>>, vector<1x8x8x128xf32>
    %10 = vector.shape_cast %9 : vector<1x8x8x128xf32> to vector<8x8x128xf32>
    %11 = vector.shape_cast %10 : vector<8x8x128xf32> to vector<64x128xf32>
    %12 = tpu.concatenate %6, %11 in 1 : vector<64x128xf32>, vector<64x128xf32> -> vector<64x256xf32>
    %c0_5 = arith.constant 0 : index
    %c0_6 = arith.constant 0 : index
    %13 = vector.load %arg3[%c0_5, %c0_6] : memref<256x384xf32, #tpu.memory_space<vmem>>, vector<256x384xf32>
    %cst = arith.constant dense<0.000000e+00> : vector<64x384xf32>
    %14 = tpu.matmul %12, %13, %cst {dimension_numbers = #tpu.dot_dimension_numbers<[1], [0], [0], [1], [0, 0, 1, 1], [], []>} : vector<64x256xf32>, vector<256x384xf32>, vector<64x384xf32> -> vector<64x384xf32>
    %15 = vector.extract_strided_slice %14 {offsets = [0, 0], sizes = [64, 256], strides = [1, 1]} : vector<64x384xf32> to vector<64x256xf32>
    %16 = vector.extract_strided_slice %14 {offsets = [0, 256], sizes = [64, 128], strides = [1, 1]} : vector<64x384xf32> to vector<64x128xf32>
    %17 = vector.extract_strided_slice %15 {offsets = [0, 0], sizes = [64, 128], strides = [1, 1]} : vector<64x256xf32> to vector<64x128xf32>
    %cst_7 = arith.constant 0.000000e+00 : f32
    %18 = vector.broadcast %cst_7 : f32 to vector<64x128xf32>
    %19 = arith.maximumf %17, %18 : vector<64x128xf32>
    %20 = vector.extract_strided_slice %15 {offsets = [0, 128], sizes = [64, 128], strides = [1, 1]} : vector<64x256xf32> to vector<64x128xf32>
    %21 = arith.mulf %20, %20 : vector<64x128xf32>
    %22 = arith.mulf %16, %16 : vector<64x128xf32>
    %23 = arith.addf %21, %22 : vector<64x128xf32>
    %24 = math.sqrt %23 : vector<64x128xf32>
    %cst_8 = arith.constant 0.707106769 : f32
    %25 = vector.broadcast %cst_8 : f32 to vector<64x128xf32>
    %26 = arith.mulf %24, %25 : vector<64x128xf32>
    %cst_9 = arith.constant 2.500000e+01 : f32
    %27 = vector.broadcast %cst_9 : f32 to vector<64x128xf32>
    %28 = arith.mulf %27, %19 : vector<64x128xf32>
    %c0_10 = arith.constant 0 : index
    %c0_11 = arith.constant 0 : index
    %c0_12 = arith.constant 0 : index
    %29 = vector.load %arg4[%c0_10, %c0_11, %c0_12] : memref<1x64x256xf32, #tpu.memory_space<vmem>>, vector<1x64x128xf32>
    %30 = vector.shape_cast %29 : vector<1x64x128xf32> to vector<64x128xf32>
    %31 = vector.shape_cast %28 : vector<64x128xf32> to vector<1x64x128xf32>
    tpu.vector_store %arg4[%c0_10, %c0_11, %c0_12], %31 {strides = array<i32>} : memref<1x64x256xf32, #tpu.memory_space<vmem>>, vector<1x64x128xf32>,
    %cst_13 = arith.constant 2.500000e+01 : f32
    %32 = vector.broadcast %cst_13 : f32 to vector<64x128xf32>
    %33 = arith.mulf %32, %26 : vector<64x128xf32>
    %c0_14 = arith.constant 0 : index
    %c0_15 = arith.constant 0 : index
    %c128 = arith.constant 128 : index
    %34 = vector.load %arg4[%c0_14, %c0_15, %c128] : memref<1x64x256xf32, #tpu.memory_space<vmem>>, vector<1x64x128xf32>
    %35 = vector.shape_cast %34 : vector<1x64x128xf32> to vector<64x128xf32>
    %36 = vector.shape_cast %33 : vector<64x128xf32> to vector<1x64x128xf32>
    tpu.vector_store %arg4[%c0_14, %c0_15, %c128], %36 {strides = array<i32>} : memref<1x64x256xf32, #tpu.memory_space<vmem>>, vector<1x64x128xf32>,
    return
  }
  func.func @transform_0(%arg0: i32, %arg1: i32) -> (i32, i32, i32, i32) {
    %c0_i32 = arith.constant 0 : i32
    %c0_i32_0 = arith.constant 0 : i32
    %c0_i32_1 = arith.constant 0 : i32
    %c0_i32_2 = arith.constant 0 : i32
    return %arg0, %c0_i32, %c0_i32_0, %c0_i32_1 : i32, i32, i32, i32
  }
  func.func @transform_1(%arg0: i32, %arg1: i32) -> (i32, i32) {
    %c0_i32 = arith.constant 0 : i32
    %c0_i32_0 = arith.constant 0 : i32
    %c0_i32_1 = arith.constant 0 : i32
    return %c0_i32, %c0_i32_0 : i32, i32
  }
  func.func @transform_2(%arg0: i32, %arg1: i32) -> (i32, i32, i32) {
    %c0_i32 = arith.constant 0 : i32
    %c0_i32_0 = arith.constant 0 : i32
    return %arg0, %arg1, %c0_i32 : i32, i32, i32
  }
}

module attributes {stable_mosaic.version = 11 : i64} {
  func.func @vone_kernel(%arg0: i32, %arg1: i32, %arg2: memref<1x9x8x128xf32, #tpu.memory_space<vmem>>, %arg3: memref<256x384xf32, #tpu.memory_space<vmem>>, %arg4: memref<1x64x256xf32, #tpu.memory_space<vmem>>) attributes {dimension_semantics = [#tpu.dimension_semantics<parallel>, #tpu.dimension_semantics<parallel>], iteration_bounds = array<i64: 2, 1>, scalar_prefetch = 0 : i64, scratch_operands = 0 : i64, tpu.core_type = #tpu.core_type<tc>, window_params = [{transform_indices = @transform_0, window_bounds = array<i64: 1, 9, 8, 128>}, {pipeline_mode = #tpu.pipeline_mode<synchronous>, transform_indices = @transform_1, window_bounds = array<i64: 256, 384>}, {transform_indices = @transform_2, window_bounds = array<i64: 1, 64, 256>}]} {
    %c8_i32 = arith.constant 8 : i32
    %0 = arith.muli %arg1, %c8_i32 : i32
    %1 = tpu.assume_multiple %0, 8 : i32
    %c0_i32 = arith.constant 0 : i32
    %2 = arith.addi %1, %c0_i32 : i32
    %c0 = arith.constant 0 : index
    %3 = arith.index_cast %2 : i32 to index
    %c0_0 = arith.constant 0 : index
    %c0_1 = arith.constant 0 : index
    %4 = vector.load %arg2[%c0, %3, %c0_0, %c0_1] : memref<1x9x8x128xf32, #tpu.memory_space<vmem>>, vector<1x8x8x128xf32>
    %5 = vector.shape_cast %4 : vector<1x8x8x128xf32> to vector<8x8x128xf32>
    %6 = vector.shape_cast %5 : vector<8x8x128xf32> to vector<64x128xf32>
    %c1_i32 = arith.constant 1 : i32
    %7 = arith.addi %1, %c1_i32 : i32
    %c0_2 = arith.constant 0 : index
    %8 = arith.index_cast %7 : i32 to index
    %c0_3 = arith.constant 0 : index
    %c0_4 = arith.constant 0 : index
    %9 = vector.load %arg2[%c0_2, %8, %c0_3, %c0_4] : memref<1x9x8x128xf32, #tpu.memory_space<vmem>>, vector<1x8x8x128xf32>
    %10 = vector.shape_cast %9 : vector<1x8x8x128xf32> to vector<8x8x128xf32>
    %11 = vector.shape_cast %10 : vector<8x8x128xf32> to vector<64x128xf32>
    %12 = tpu.concatenate %6, %11 in 1 : vector<64x128xf32>, vector<64x128xf32> -> vector<64x256xf32>
    %c0_5 = arith.constant 0 : index
    %c0_6 = arith.constant 0 : index
    %13 = vector.load %arg3[%c0_5, %c0_6] : memref<256x384xf32, #tpu.memory_space<vmem>>, vector<256x384xf32>
    %cst = arith.constant dense<0.000000e+00> : vector<64x384xf32>
    %14 = tpu.matmul %12, %13, %cst {dimension_numbers = #tpu.dot_dimension_numbers<[1], [0], [0], [1], [0, 0, 1, 1], [], []>} : vector<64x256xf32>, vector<256x384xf32>, vector<64x384xf32> -> vector<64x384xf32>
    %15 = vector.extract_strided_slice %14 {offsets = [0, 0], sizes = [64, 256], strides = [1, 1]} : vector<64x384xf32> to vector<64x256xf32>
    %16 = vector.extract_strided_slice %14 {offsets = [0, 256], sizes = [64, 128], strides = [1, 1]} : vector<64x384xf32> to vector<64x128xf32>
    %17 = vector.extract_strided_slice %15 {offsets = [0, 0], sizes = [64, 128], strides = [1, 1]} : vector<64x256xf32> to vector<64x128xf32>
    %cst_7 = arith.constant 0.000000e+00 : f32
    %18 = vector.broadcast %cst_7 : f32 to vector<64x128xf32>
    %19 = arith.maximumf %17, %18 : vector<64x128xf32>
    %20 = vector.extract_strided_slice %15 {offsets = [0, 128], sizes = [64, 128], strides = [1, 1]} : vector<64x256xf32> to vector<64x128xf32>
    %21 = arith.mulf %20, %20 : vector<64x128xf32>
    %22 = arith.mulf %16, %16 : vector<64x128xf32>
    %23 = arith.addf %21, %22 : vector<64x128xf32>
    %24 = math.sqrt %23 : vector<64x128xf32>
    %cst_8 = arith.constant 0.707106769 : f32
    %25 = vector.broadcast %cst_8 : f32 to vector<64x128xf32>
    %26 = arith.mulf %24, %25 : vector<64x128xf32>
    %cst_9 = arith.constant 2.500000e+01 : f32
    %27 = vector.broadcast %cst_9 : f32 to vector<64x128xf32>
    %28 = arith.mulf %27, %19 : vector<64x128xf32>
    %c0_10 = arith.constant 0 : index
    %c0_11 = arith.constant 0 : index
    %c0_12 = arith.constant 0 : index
    %29 = vector.load %arg4[%c0_10, %c0_11, %c0_12] : memref<1x64x256xf32, #tpu.memory_space<vmem>>, vector<1x64x128xf32>
    %30 = vector.shape_cast %29 : vector<1x64x128xf32> to vector<64x128xf32>
    %31 = vector.shape_cast %28 : vector<64x128xf32> to vector<1x64x128xf32>
    tpu.vector_store %arg4[%c0_10, %c0_11, %c0_12], %31 {strides = array<i32>} : memref<1x64x256xf32, #tpu.memory_space<vmem>>, vector<1x64x128xf32>,
    %cst_13 = arith.constant 2.500000e+01 : f32
    %32 = vector.broadcast %cst_13 : f32 to vector<64x128xf32>
    %33 = arith.mulf %32, %26 : vector<64x128xf32>
    %c0_14 = arith.constant 0 : index
    %c0_15 = arith.constant 0 : index
    %c128 = arith.constant 128 : index
    %34 = vector.load %arg4[%c0_14, %c0_15, %c128] : memref<1x64x256xf32, #tpu.memory_space<vmem>>, vector<1x64x128xf32>
    %35 = vector.shape_cast %34 : vector<1x64x128xf32> to vector<64x128xf32>
    %36 = vector.shape_cast %33 : vector<64x128xf32> to vector<1x64x128xf32>
    tpu.vector_store %arg4[%c0_14, %c0_15, %c128], %36 {strides = array<i32>} : memref<1x64x256xf32, #tpu.memory_space<vmem>>, vector<1x64x128xf32>,
    return
  }
  func.func @transform_0(%arg0: i32, %arg1: i32) -> (i32, i32, i32, i32) {
    %c0_i32 = arith.constant 0 : i32
    %c0_i32_0 = arith.constant 0 : i32
    %c0_i32_1 = arith.constant 0 : i32
    %c0_i32_2 = arith.constant 0 : i32
    return %arg0, %c0_i32, %c0_i32_0, %c0_i32_1 : i32, i32, i32, i32
  }
  func.func @transform_1(%arg0: i32, %arg1: i32) -> (i32, i32) {
    %c0_i32 = arith.constant 0 : i32
    %c0_i32_0 = arith.constant 0 : i32
    %c0_i32_1 = arith.constant 0 : i32
    return %c0_i32, %c0_i32_0 : i32, i32
  }
  func.func @transform_2(%arg0: i32, %arg1: i32) -> (i32, i32, i32) {
    %c0_i32 = arith.constant 0 : i32
    %c0_i32_0 = arith.constant 0 : i32
    return %arg0, %arg1, %c0_i32 : i32, i32, i32
  }
}

</mosaic_0001>

<llo_original>
// kernel: vone_block_forward.1
$region0: #{vone_block_forward.1}
  #allocation0 [shape = 'u32[]', space=smem, size = 0x4, offset = 0x4, fixed_abs, tag = 'smem constant byte address 0x4 - core index']
  #allocation1 [shape = 'u32[144,128]{1,0:T(1,128)}', space=vmem, size = 0x12000, scoped, tag = 'internal scratch']
  %s0 = inlined_call_operand.vmem [shape: f32[2,9,8,128], index: 0, kind: input, shape index: {}]
  %s1 = inlined_call_operand.vmem [shape: f32[256,384], index: 1, kind: input, shape index: {}]
  %s2 = inlined_call_operand.hbm [shape: f32[2,64,256], index: 2, kind: output, shape index: {}]
  %s3 = sld [smem:[#allocation0]]
  $region41: #{vone_block_forward.1} parent=0
    _
  %s5 = ssub.s32 1, %s3
  %s6 = scalar_select 0, %s5, %s3
  $region1: #{vone_block_forward.1} parent=0
    #allocation2 [shape = 'u8[131072]{0}', space=vmem, size = 0x20000, scoped, tag = 'output window, operand 0']
    #allocation3 [shape = 's32[2]{0}', space=sflag, size = 0x8, scoped, tag = 'scoped memory for vone_block_forward.1']
    %7 = vsyncpa [#allocation3], 0
    %s8 = scalar_lea.sflag [#allocation3], 1
    %9 = vsyncpa %s8, 0
    loop: start=0, step=1, limit=4
    $region2: #{vone_block_forward.1} parent=1 // loop_pre_header
      _
    $region3: #{vone_block_forward.1} parent=1 // loop_header
      %s11 = sphi 0, %s15
      %p12 = scmp.ge.s32.totalorder %s11, 4
      %s18 = sphi 0, %s30
      %s19 = sphi 0, %s26
      %s20 = sphi 0, %s18
      %s21 = sphi 0, %s19
      %s22 = sphi 0, %s20
      %s23 = sphi 0, %s21
      %s33 = sphi 0, %s35
      %s36 = sphi 0, %s33
      %s37 = sphi 0, %s36
      %s53 = sphi 0, %s37
      %s57 = sphi 0, %s57
      %s59 = sphi 0, %s57
      %s60 = sphi 0, %s59
      %s74 = sphi 0, %s60
      %s82 = sphi 0, %s84
      %s85 = sphi 0, %s82
      %s86 = sphi 0, %s85
      %s102 = sphi 0, %s86
    $region4: #{vone_block_forward.1} parent=1 // loop_header_branch
      %14 = sbr.rel (%p12) target = $region8
    $region5: #{vone_block_forward.1} parent=1 // loop_body
      %s16 = ssub.s32 %s11, 1
      %s17 = ssub.s32 %s11, 2
      %s24 = sadd.s32 1, %s19
      %p25 = scmp.ge.s32.totalorder %s24, 1
      %s26 = scalar_select %p25, 0, %s24
      %s27 = sadd.s32 1, %s18
      %s28 = scalar_select %p25, %s27, %s18
      %p29 = scmp.ge.s32.totalorder %s28, 2
      %s30 = scalar_select %p29, 0, %s28
      %s31 = ssub.s32 %s18, %s30
      %p32 = scmp.eq.s32.totalorder %s31, 0
      %s34 = sadd.s32 %s33, 1
      %s35 = scalar_select %p32, %s33, %s34
      %p38 = pneg %p32
      %p39 = scmp.eq.s32.totalorder %s11, 1
      %p40 = por %p38, %p39
      %p41 = scmp.ne.s32.totalorder %s33, %s36
      %p42 = scmp.eq.s32.totalorder %s11, 0
      %p43 = por %p41, %p42
      %p44 = scmp.ne.s32.totalorder %s33, %s36
      %p45 = scmp.eq.s32.totalorder %s16, 1
      %p46 = por %p44, %p45
      %p47 = scmp.ne.s32.totalorder %s36, %s37
      %p48 = scmp.eq.s32.totalorder %s16, 0
      %p49 = por %p47, %p48
      %p50 = scmp.ne.s32.totalorder %s36, %s37
      %p51 = scmp.eq.s32.totalorder %s17, 1
      %p52 = por %p50, %p51
      %p54 = scmp.ne.s32.totalorder %s37, %s53
      %p55 = scmp.eq.s32.totalorder %s17, 0
      %p56 = por %p54, %p55
      %s58 = sadd.s32 %s57, 1
      %p61 = scmp.eq.s32.totalorder %s11, 1
      %p62 = scmp.ne.s32.totalorder %s57, %s59
      %p63 = scmp.eq.s32.totalorder %s11, 0
      %p64 = por %p62, %p63
      %p65 = scmp.ne.s32.totalorder %s57, %s59
      %p66 = scmp.eq.s32.totalorder %s16, 1
      %p67 = por %p65, %p66
      %p68 = scmp.ne.s32.totalorder %s59, %s60
      %p69 = scmp.eq.s32.totalorder %s16, 0
      %p70 = por %p68, %p69
      %p71 = scmp.ne.s32.totalorder %s59, %s60
      %p72 = scmp.eq.s32.totalorder %s17, 1
      %p73 = por %p71, %p72
      %p75 = scmp.ne.s32.totalorder %s60, %s74
      %p76 = scmp.eq.s32.totalorder %s17, 0
      %p77 = por %p75, %p76
      %s78 = ssub.s32 %s18, %s30
      %s79 = ssub.s32 %s19, %s26
      %s80 = sor.u32 %s78, %s79
      %p81 = scmp.eq.s32.totalorder %s80, 0
      %s83 = sadd.s32 %s82, 1
      %s84 = scalar_select %p81, %s82, %s83
      %p87 = pneg %p81
      %p88 = scmp.eq.s32.totalorder %s11, 1
      %p89 = por %p87, %p88
      %p90 = scmp.ne.s32.totalorder %s82, %s85
      %p91 = scmp.eq.s32.totalorder %s11, 0
      %p92 = por %p90, %p91
      %p93 = scmp.ne.s32.totalorder %s82, %s85
      %p94 = scmp.eq.s32.totalorder %s16, 1
      %p95 = por %p93, %p94
      %p96 = scmp.ne.s32.totalorder %s85, %s86
      %p97 = scmp.eq.s32.totalorder %s16, 0
      %p98 = por %p96, %p97
      %p99 = scmp.ne.s32.totalorder %s85, %s86
      %p100 = scmp.eq.s32.totalorder %s17, 1
      %p101 = por %p99, %p100
      %p103 = scmp.ne.s32.totalorder %s86, %s102
      %p104 = scmp.eq.s32.totalorder %s17, 0
      %p105 = por %p103, %p104
      %p106 = scmp.le.s32.totalorder 1, %s11
      %p107 = scmp.lt.s32.totalorder %s11, 3
      %p108 = pnand %p106, %p107
      %p109 = pneg %p108
      // Predicated region
      $region9: #{vone_block_forward.1} parent=5 // pred_check
        _
      $region10: #{vone_block_forward.1} parent=5 // pred_check_branch
        %111 = sbr.rel (%p108) target = $region12
      $region11: #{vone_block_forward.1} parent=5 // pred_region
        %s112 = ssub.s32 %s11, 1
        // Predicated region
        $region13: #{vone_block_forward.1} parent=11 // pred_check
          %p113 = pneg %p70
        $region14: #{vone_block_forward.1} parent=11 // pred_check_branch
          %115 = sbr.rel (%p113) target = $region16
        $region15: #{vone_block_forward.1} parent=11 // pred_region
          _
        $region16: #{vone_block_forward.1} parent=11 // pred_fallthru
          _
      $region12: #{vone_block_forward.1} parent=5 // pred_fallthru
        _
      %p116 = scmp.lt.s32.totalorder %s11, 2
      // Predicated region
      $region17: #{vone_block_forward.1} parent=5 // pred_check
        %p117 = pneg %p116
      $region18: #{vone_block_forward.1} parent=5 // pred_check_branch
        %119 = sbr.rel (%p117) target = $region20
      $region19: #{vone_block_forward.1} parent=5 // pred_region
        // Predicated region
        $region21: #{vone_block_forward.1} parent=19 // pred_check
          %p120 = pneg %p43
        $region22: #{vone_block_forward.1} parent=19 // pred_check_branch
          %122 = sbr.rel (%p120) target = $region24
        $region23: #{vone_block_forward.1} parent=19 // pred_region
          %p123 = scmp.lt.s32.totalorder %s18, 1
          %s124 = scalar_select %p123, %s18, 1
          %s125 = smul.addr %s124, 9
          %s126 = smul.addr %s125, 8
          %s127 = scalar_lea.vmem %s0, %s126
        $region24: #{vone_block_forward.1} parent=19 // pred_fallthru
          _
      $region20: #{vone_block_forward.1} parent=5 // pred_fallthru
        _
      %p128 = scmp.le.s32.totalorder 1, %s11
      %p129 = scmp.lt.s32.totalorder %s11, 3
      %p130 = pnand %p128, %p129
      %p131 = pneg %p130
      // Predicated region
      $region25: #{vone_block_forward.1} parent=5 // pred_check
        _
      $region26: #{vone_block_forward.1} parent=5 // pred_check_branch
        %133 = sbr.rel (%p130) target = $region28
      $region27: #{vone_block_forward.1} parent=5 // pred_region
        %s134 = ssub.s32 %s11, 1
        %p135 = scmp.lt.s32.totalorder %s20, 1
        %s136 = scalar_select %p135, %s20, 1
        %s137 = smul.addr %s136, 9
        %s138 = smul.addr %s137, 8
        %s139 = scalar_lea.vmem %s0, %s138
        %p140 = pneg %p49
        %p141 = pneg %p46
        %p142 = pneg %p70
        %p143 = pneg %p67
        %p144 = pneg %p98
        %p145 = pneg %p95
        %s146 = sand.u32 %s85, 1
        %s147 = scalar_lea.sflag [#allocation3], %s146
        %s148 = sand.u32 %s85, 1
        %s149 = smul.addr %s148, 128
        %s150 = scalar_lea.vmem [#allocation2], %s149
        %p151 = scmp.lt.s32.totalorder %s20, 1
        %s152 = scalar_select %p151, %s20, 1
        %s153 = smul.addr %s152, 9
        %s154 = smul.addr %s153, 8
        %s155 = scalar_lea.vmem %s0, %s154
        %s156 = smul.u32 8, %s21
        %s157 = smul.u32 %s21, 8
        %s158 = smul.u32 %s157, 8
        %s159 = scalar_lea.vmem %s155, %s158
        %v160 = vld [vmem:[%s159] sm:$0xff]
        %v161 = vld [vmem:[%s159 + $0x8] sm:$0xff]
        %v162 = vld [vmem:[%s159 + $0x10] sm:$0xff]
        %v163 = vld [vmem:[%s159 + $0x18] sm:$0xff]
        %v164 = vld [vmem:[%s159 + $0x20] sm:$0xff]
        %v165 = vld [vmem:[%s159 + $0x28] sm:$0xff]
        %v166 = vld [vmem:[%s159 + $0x30] sm:$0xff]
        %v167 = vld [vmem:[%s159 + $0x38] sm:$0xff]
        %s168 = sadd.s32 %s157, 1
        %s169 = smul.u32 %s168, 8
        %s170 = scalar_lea.vmem %s155, %s169
        %v171 = vld [vmem:[%s170] sm:$0xff]
        %v172 = vld [vmem:[%s170 + $0x8] sm:$0xff]
        %v173 = vld [vmem:[%s170 + $0x10] sm:$0xff]
        %v174 = vld [vmem:[%s170 + $0x18] sm:$0xff]
        %v175 = vld [vmem:[%s170 + $0x20] sm:$0xff]
        %v176 = vld [vmem:[%s170 + $0x28] sm:$0xff]
        %v177 = vld [vmem:[%s170 + $0x30] sm:$0xff]
        %v178 = vld [vmem:[%s170 + $0x38] sm:$0xff]
        %v179 = vld [vmem:[%s1] sm:$0xff]
        %v180 = vld [vmem:[%s1 + $0x8] sm:$0xff]
        %v181 = vld [vmem:[%s1 + $0x10] sm:$0xff]
        %v182 = vld [vmem:[%s1 + $0x18] sm:$0xff]
        %v183 = vld [vmem:[%s1 + $0x20] sm:$0xff]
        %v184 = vld [vmem:[%s1 + $0x28] sm:$0xff]
        %v185 = vld [vmem:[%s1 + $0x30] sm:$0xff]
        %v186 = vld [vmem:[%s1 + $0x38] sm:$0xff]
        %v187 = vld [vmem:[%s1 + $0x40] sm:$0xff]
        %v188 = vld [vmem:[%s1 + $0x48] sm:$0xff]
        %v189 = vld [vmem:[%s1 + $0x50] sm:$0xff]
        %v190 = vld [vmem:[%s1 + $0x58] sm:$0xff]
        %v191 = vld [vmem:[%s1 + $0x60] sm:$0xff]
        %v192 = vld [vmem:[%s1 + $0x68] sm:$0xff]
        %v193 = vld [vmem:[%s1 + $0x70] sm:$0xff]
        %v194 = vld [vmem:[%s1 + $0x78] sm:$0xff]
        %v195 = vld [vmem:[%s1 + $0x80] sm:$0xff]
        %v196 = vld [vmem:[%s1 + $0x88] sm:$0xff]
        %v197 = vld [vmem:[%s1 + $0x90] sm:$0xff]
        %v198 = vld [vmem:[%s1 + $0x98] sm:$0xff]
        %v199 = vld [vmem:[%s1 + $0xa0] sm:$0xff]
        %v200 = vld [vmem:[%s1 + $0xa8] sm:$0xff]
        %v201 = vld [vmem:[%s1 + $0xb0] sm:$0xff]
        %v202 = vld [vmem:[%s1 + $0xb8] sm:$0xff]
        %v203 = vld [vmem:[%s1 + $0xc0] sm:$0xff]
        %v204 = vld [vmem:[%s1 + $0xc8] sm:$0xff]
        %v205 = vld [vmem:[%s1 + $0xd0] sm:$0xff]
        %v206 = vld [vmem:[%s1 + $0xd8] sm:$0xff]
        %v207 = vld [vmem:[%s1 + $0xe0] sm:$0xff]
        %v208 = vld [vmem:[%s1 + $0xe8] sm:$0xff]
        %v209 = vld [vmem:[%s1 + $0xf0] sm:$0xff]
        %v210 = vld [vmem:[%s1 + $0xf8] sm:$0xff]
        %v211 = vld [vmem:[%s1 + $0x100] sm:$0xff]
        %v212 = vld [vmem:[%s1 + $0x108] sm:$0xff]
        %v213 = vld [vmem:[%s1 + $0x110] sm:$0xff]
        %v214 = vld [vmem:[%s1 + $0x118] sm:$0xff]
        %v215 = vld [vmem:[%s1 + $0x120] sm:$0xff]
        %v216 = vld [vmem:[%s1 + $0x128] sm:$0xff]
        %v217 = vld [vmem:[%s1 + $0x130] sm:$0xff]
        %v218 = vld [vmem:[%s1 + $0x138] sm:$0xff]
        %v219 = vld [vmem:[%s1 + $0x140] sm:$0xff]
        %v220 = vld [vmem:[%s1 + $0x148] sm:$0xff]
        %v221 = vld [vmem:[%s1 + $0x150] sm:$0xff]
        %v222 = vld [vmem:[%s1 + $0x158] sm:$0xff]
        %v223 = vld [vmem:[%s1 + $0x160] sm:$0xff]
        %v224 = vld [vmem:[%s1 + $0x168] sm:$0xff]
        %v225 = vld [vmem:[%s1 + $0x170] sm:$0xff]
        %v226 = vld [vmem:[%s1 + $0x178] sm:$0xff]
        %v227 = vld [vmem:[%s1 + $0x180] sm:$0xff]
        %v228 = vld [vmem:[%s1 + $0x188] sm:$0xff]
        %v229 = vld [vmem:[%s1 + $0x190] sm:$0xff]
        %v230 = vld [vmem:[%s1 + $0x198] sm:$0xff]
        %v231 = vld [vmem:[%s1 + $0x1a0] sm:$0xff]
        %v232 = vld [vmem:[%s1 + $0x1a8] sm:$0xff]
        %v233 = vld [vmem:[%s1 + $0x1b0] sm:$0xff]
        %v234 = vld [vmem:[%s1 + $0x1b8] sm:$0xff]
        %v235 = vld [vmem:[%s1 + $0x1c0] sm:$0xff]
        %v236 = vld [vmem:[%s1 + $0x1c8] sm:$0xff]
        %v237 = vld [vmem:[%s1 + $0x1d0] sm:$0xff]
        %v238 = vld [vmem:[%s1 + $0x1d8] sm:$0xff]
        %v239 = vld [vmem:[%s1 + $0x1e0] sm:$0xff]
        %v240 = vld [vmem:[%s1 + $0x1e8] sm:$0xff]
        %v241 = vld [vmem:[%s1 + $0x1f0] sm:$0xff]
        %v242 = vld [vmem:[%s1 + $0x1f8] sm:$0xff]
        %v243 = vld [vmem:[%s1 + $0x200] sm:$0xff]
        %v244 = vld [vmem:[%s1 + $0x208] sm:$0xff]
        %v245 = vld [vmem:[%s1 + $0x210] sm:$0xff]
        %v246 = vld [vmem:[%s1 + $0x218] sm:$0xff]
        %v247 = vld [vmem:[%s1 + $0x220] sm:$0xff]
        %v248 = vld [vmem:[%s1 + $0x228] sm:$0xff]
        %v249 = vld [vmem:[%s1 + $0x230] sm:$0xff]
        %v250 = vld [vmem:[%s1 + $0x238] sm:$0xff]
        %v251 = vld [vmem:[%s1 + $0x240] sm:$0xff]
        %v252 = vld [vmem:[%s1 + $0x248] sm:$0xff]
        %v253 = vld [vmem:[%s1 + $0x250] sm:$0xff]
        %v254 = vld [vmem:[%s1 + $0x258] sm:$0xff]
        %v255 = vld [vmem:[%s1 + $0x260] sm:$0xff]
        %v256 = vld [vmem:[%s1 + $0x268] sm:$0xff]
        %v257 = vld [vmem:[%s1 + $0x270] sm:$0xff]
        %v258 = vld [vmem:[%s1 + $0x278] sm:$0xff]
        %v259 = vld [vmem:[%s1 + $0x280] sm:$0xff]
        %v260 = vld [vmem:[%s1 + $0x288] sm:$0xff]
        %v261 = vld [vmem:[%s1 + $0x290] sm:$0xff]
        %v262 = vld [vmem:[%s1 + $0x298] sm:$0xff]
        %v263 = vld [vmem:[%s1 + $0x2a0] sm:$0xff]
        %v264 = vld [vmem:[%s1 + $0x2a8] sm:$0xff]
        %v265 = vld [vmem:[%s1 + $0x2b0] sm:$0xff]
        %v266 = vld [vmem:[%s1 + $0x2b8] sm:$0xff]
        %v267 = vld [vmem:[%s1 + $0x2c0] sm:$0xff]
        %v268 = vld [vmem:[%s1 + $0x2c8] sm:$0xff]
        %v269 = vld [vmem:[%s1 + $0x2d0] sm:$0xff]
        %v270 = vld [vmem:[%s1 + $0x2d8] sm:$0xff]
        %v271 = vld [vmem:[%s1 + $0x2e0] sm:$0xff]
        %v272 = vld [vmem:[%s1 + $0x2e8] sm:$0xff]
        %v273 = vld [vmem:[%s1 + $0x2f0] sm:$0xff]
        %v274 = vld [vmem:[%s1 + $0x2f8] sm:$0xff]
        %275 = vmatprep.subr.mxu0 %v225
        %276 = vmatpush1.msra.mxu0 %v224
        %277 = vmatprep.subr.mxu0 %v222
        %278 = vmatpush1.msra.mxu0 %v221
        %279 = vmatprep.subr.mxu0 %v219
        %280 = vmatpush1.msra.mxu0 %v218
        %281 = vmatprep.subr.mxu0 %v216
        %282 = vmatpush1.msra.mxu0 %v215
        %283 = vmatprep.subr.mxu0 %v213
        %284 = vmatpush1.msra.mxu0 %v212
        %285 = vmatprep.subr.mxu0 %v210
        %286 = vmatpush1.msra.mxu0 %v209
        %287 = vmatprep.subr.mxu0 %v207
        %288 = vmatpush1.msra.mxu0 %v206
        %289 = vmatprep.subr.mxu0 %v204
        %290 = vmatpush1.msra.mxu0 %v203
        %291 = vmatprep.subr.mxu0 %v201
        %292 = vmatpush1.msra.mxu0 %v200
        %293 = vmatprep.subr.mxu0 %v198
        %294 = vmatpush1.msra.mxu0 %v197
        %295 = vmatprep.subr.mxu0 %v195
        %296 = vmatpush1.msra.mxu0 %v194
        %297 = vmatprep.subr.mxu0 %v192
        %298 = vmatpush1.msra.mxu0 %v191
        %299 = vmatprep.subr.mxu0 %v189
        %300 = vmatpush1.msra.mxu0 %v188
        %301 = vmatprep.subr.mxu0 %v186
        %302 = vmatpush1.msra.mxu0 %v185
        %303 = vmatprep.subr.mxu0 %v183
        %304 = vmatpush1.msra.mxu0 %v182
        %305 = vmatprep.subr.mxu0 %v180
        %306 = vmatpush1.msra.mxu0 %v179
        %307 = vmatprep.subr.mxu0 %v273
        %308 = vmatpush2.msra.mxu0 %v272
        %309 = vmatprep.subr.mxu0 %v270
        %310 = vmatpush2.msra.mxu0 %v269
        %311 = vmatprep.subr.mxu0 %v267
        %312 = vmatpush2.msra.mxu0 %v266
        %313 = vmatprep.subr.mxu0 %v264
        %314 = vmatpush2.msra.mxu0 %v263
        %315 = vmatprep.subr.mxu0 %v261
        %316 = vmatpush2.msra.mxu0 %v260
        %317 = vmatprep.subr.mxu0 %v258
        %318 = vmatpush2.msra.mxu0 %v257
        %319 = vmatprep.subr.mxu0 %v255
        %320 = vmatpush2.msra.mxu0 %v254
        %321 = vmatprep.subr.mxu0 %v252
        %322 = vmatpush2.msra.mxu0 %v251
        %323 = vmatprep.subr.mxu0 %v249
        %324 = vmatpush2.msra.mxu0 %v248
        %325 = vmatprep.subr.mxu0 %v246
        %326 = vmatpush2.msra.mxu0 %v245
        %327 = vmatprep.subr.mxu0 %v243
        %328 = vmatpush2.msra.mxu0 %v242
        %329 = vmatprep.subr.mxu0 %v240
        %330 = vmatpush2.msra.mxu0 %v239
        %331 = vmatprep.subr.mxu0 %v237
        %332 = vmatpush2.msra.mxu0 %v236
        %333 = vmatprep.subr.mxu0 %v234
        %334 = vmatpush2.msra.mxu0 %v233
        %335 = vmatprep.subr.mxu0 %v231
        %336 = vmatpush2.msra.mxu0 %v230
        %337 = vmatprep.subr.mxu0 %v228
        %338 = vmatpush2.msra.mxu0 %v227
        %339 = vmatprep.mubr.f32.mxu0 %v171
        %340 = vmatmul.mubr.f32.gmra.mxu0 %v160
        %v341 = vpop.f32.mrf.mxu0
        %v342 = vadd.f32 0.0, %v341
        %v343 = vpop.f32.mrf.mxu0
        %v344 = vadd.f32 0.0, %v343
        %345 = vmatprep.mubr.f32.mxu0 %v172
        %346 = vmatmul.mubr.f32.gmra.mxu0 %v161
        %v347 = vpop.f32.mrf.mxu0
        %v348 = vadd.f32 0.0, %v347
        %v349 = vpop.f32.mrf.mxu0
        %v350 = vadd.f32 0.0, %v349
        %351 = vmatprep.mubr.f32.mxu0 %v173
        %352 = vmatmul.mubr.f32.gmra.mxu0 %v162
        %v353 = vpop.f32.mrf.mxu0
        %v354 = vadd.f32 0.0, %v353
        %v355 = vpop.f32.mrf.mxu0
        %v356 = vadd.f32 0.0, %v355
        %357 = vmatprep.mubr.f32.mxu0 %v174
        %358 = vmatmul.mubr.f32.gmra.mxu0 %v163
        %v359 = vpop.f32.mrf.mxu0
        %v360 = vadd.f32 0.0, %v359
        %v361 = vpop.f32.mrf.mxu0
        %v362 = vadd.f32 0.0, %v361
        %363 = vmatprep.mubr.f32.mxu0 %v175
        %364 = vmatmul.mubr.f32.gmra.mxu0 %v164
        %v365 = vpop.f32.mrf.mxu0
        %v366 = vadd.f32 0.0, %v365
        %v367 = vpop.f32.mrf.mxu0
        %v368 = vadd.f32 0.0, %v367
        %369 = vmatprep.mubr.f32.mxu0 %v176
        %370 = vmatmul.mubr.f32.gmra.mxu0 %v165
        %v371 = vpop.f32.mrf.mxu0
        %v372 = vadd.f32 0.0, %v371
        %v373 = vpop.f32.mrf.mxu0
        %v374 = vadd.f32 0.0, %v373
        %375 = vmatprep.mubr.f32.mxu0 %v177
        %376 = vmatmul.mubr.f32.gmra.mxu0 %v166
        %v377 = vpop.f32.mrf.mxu0
        %v378 = vadd.f32 0.0, %v377
        %v379 = vpop.f32.mrf.mxu0
        %v380 = vadd.f32 0.0, %v379
        %381 = vmatprep.mubr.f32.mxu0 %v178
        %382 = vmatmul.mubr.f32.gmra.mxu0 %v167
        %v383 = vpop.f32.mrf.mxu0
        %v384 = vadd.f32 0.0, %v383
        %v385 = vpop.f32.mrf.mxu0
        %v386 = vadd.f32 0.0, %v385
        %387 = vdwg.mxu0
        %388 = vmatprep.subr.mxu0 0.0
        %389 = vmatpush1.msra.mxu0 %v226
        %390 = vmatprep.subr.mxu0 0.0
        %391 = vmatpush1.msra.mxu0 %v223
        %392 = vmatprep.subr.mxu0 0.0
        %393 = vmatpush1.msra.mxu0 %v220
        %394 = vmatprep.subr.mxu0 0.0
        %395 = vmatpush1.msra.mxu0 %v217
        %396 = vmatprep.subr.mxu0 0.0
        %397 = vmatpush1.msra.mxu0 %v214
        %398 = vmatprep.subr.mxu0 0.0
        %399 = vmatpush1.msra.mxu0 %v211
        %400 = vmatprep.subr.mxu0 0.0
        %401 = vmatpush1.msra.mxu0 %v208
        %402 = vmatprep.subr.mxu0 0.0
        %403 = vmatpush1.msra.mxu0 %v205
        %404 = vmatprep.subr.mxu0 0.0
        %405 = vmatpush1.msra.mxu0 %v202
        %406 = vmatprep.subr.mxu0 0.0
        %407 = vmatpush1.msra.mxu0 %v199
        %408 = vmatprep.subr.mxu0 0.0
        %409 = vmatpush1.msra.mxu0 %v196
        %410 = vmatprep.subr.mxu0 0.0
        %411 = vmatpush1.msra.mxu0 %v193
        %412 = vmatprep.subr.mxu0 0.0
        %413 = vmatpush1.msra.mxu0 %v190
        %414 = vmatprep.subr.mxu0 0.0
        %415 = vmatpush1.msra.mxu0 %v187
        %416 = vmatprep.subr.mxu0 0.0
        %417 = vmatpush1.msra.mxu0 %v184
        %418 = vmatprep.subr.mxu0 0.0
        %419 = vmatpush1.msra.mxu0 %v181
        %420 = vmatprep.subr.mxu0 0.0
        %421 = vmatpush2.msra.mxu0 %v274
        %422 = vmatprep.subr.mxu0 0.0
        %423 = vmatpush2.msra.mxu0 %v271
        %424 = vmatprep.subr.mxu0 0.0
        %425 = vmatpush2.msra.mxu0 %v268
        %426 = vmatprep.subr.mxu0 0.0
        %427 = vmatpush2.msra.mxu0 %v265
        %428 = vmatprep.subr.mxu0 0.0
        %429 = vmatpush2.msra.mxu0 %v262
        %430 = vmatprep.subr.mxu0 0.0
        %431 = vmatpush2.msra.mxu0 %v259
        %432 = vmatprep.subr.mxu0 0.0
        %433 = vmatpush2.msra.mxu0 %v256
        %434 = vmatprep.subr.mxu0 0.0
        %435 = vmatpush2.msra.mxu0 %v253
        %436 = vmatprep.subr.mxu0 0.0
        %437 = vmatpush2.msra.mxu0 %v250
        %438 = vmatprep.subr.mxu0 0.0
        %439 = vmatpush2.msra.mxu0 %v247
        %440 = vmatprep.subr.mxu0 0.0
        %441 = vmatpush2.msra.mxu0 %v244
        %442 = vmatprep.subr.mxu0 0.0
        %443 = vmatpush2.msra.mxu0 %v241
        %444 = vmatprep.subr.mxu0 0.0
        %445 = vmatpush2.msra.mxu0 %v238
        %446 = vmatprep.subr.mxu0 0.0
        %447 = vmatpush2.msra.mxu0 %v235
        %448 = vmatprep.subr.mxu0 0.0
        %449 = vmatpush2.msra.mxu0 %v232
        %450 = vmatprep.subr.mxu0 0.0
        %451 = vmatpush2.msra.mxu0 %v229
        %452 = vmatprep.mubr.f32.mxu0 %v171
        %453 = vmatmul.mubr.f32.gmra.mxu0 %v160
        %v454 = vpop.f32.mrf.mxu0
        %v455 = vadd.f32 0.0, %v454
        %v456 = vpop.f32.mrf.mxu0
        %457 = vmatprep.mubr.f32.mxu0 %v172
        %458 = vmatmul.mubr.f32.gmra.mxu0 %v161
        %v459 = vpop.f32.mrf.mxu0
        %v460 = vadd.f32 0.0, %v459
        %v461 = vpop.f32.mrf.mxu0
        %462 = vmatprep.mubr.f32.mxu0 %v173
        %463 = vmatmul.mubr.f32.gmra.mxu0 %v162
        %v464 = vpop.f32.mrf.mxu0
        %v465 = vadd.f32 0.0, %v464
        %v466 = vpop.f32.mrf.mxu0
        %467 = vmatprep.mubr.f32.mxu0 %v174
        %468 = vmatmul.mubr.f32.gmra.mxu0 %v163
        %v469 = vpop.f32.mrf.mxu0
        %v470 = vadd.f32 0.0, %v469
        %v471 = vpop.f32.mrf.mxu0
        %472 = vmatprep.mubr.f32.mxu0 %v175
        %473 = vmatmul.mubr.f32.gmra.mxu0 %v164
        %v474 = vpop.f32.mrf.mxu0
        %v475 = vadd.f32 0.0, %v474
        %v476 = vpop.f32.mrf.mxu0
        %477 = vmatprep.mubr.f32.mxu0 %v176
        %478 = vmatmul.mubr.f32.gmra.mxu0 %v165
        %v479 = vpop.f32.mrf.mxu0
        %v480 = vadd.f32 0.0, %v479
        %v481 = vpop.f32.mrf.mxu0
        %482 = vmatprep.mubr.f32.mxu0 %v177
        %483 = vmatmul.mubr.f32.gmra.mxu0 %v166
        %v484 = vpop.f32.mrf.mxu0
        %v485 = vadd.f32 0.0, %v484
        %v486 = vpop.f32.mrf.mxu0
        %487 = vmatprep.mubr.f32.mxu0 %v178
        %488 = vmatmul.mubr.f32.gmra.mxu0 %v167
        %v489 = vpop.f32.mrf.mxu0
        %v490 = vadd.f32 0.0, %v489
        %v491 = vpop.f32.mrf.mxu0
        %492 = vdwg.mxu0
        %v493 = vmax.f32 %v342, 0.0
        %v494 = vmax.f32 %v348, 0.0
        %v495 = vmax.f32 %v354, 0.0
        %v496 = vmax.f32 %v360, 0.0
        %v497 = vmax.f32 %v366, 0.0
        %v498 = vmax.f32 %v372, 0.0
        %v499 = vmax.f32 %v378, 0.0
        %v500 = vmax.f32 %v384, 0.0
        %v501 = vmul.f32 %v344, %v344
        %v502 = vmul.f32 %v350, %v350
        %v503 = vmul.f32 %v356, %v356
        %v504 = vmul.f32 %v362, %v362
        %v505 = vmul.f32 %v368, %v368
        %v506 = vmul.f32 %v374, %v374
        %v507 = vmul.f32 %v380, %v380
        %v508 = vmul.f32 %v386, %v386
        %v509 = vmul.f32 %v455, %v455
        %v510 = vmul.f32 %v460, %v460
        %v511 = vmul.f32 %v465, %v465
        %v512 = vmul.f32 %v470, %v470
        %v513 = vmul.f32 %v475, %v475
        %v514 = vmul.f32 %v480, %v480
        %v515 = vmul.f32 %v485, %v485
        %v516 = vmul.f32 %v490, %v490
        %v517 = vadd.f32 %v501, %v509
        %v518 = vadd.f32 %v502, %v510
        %v519 = vadd.f32 %v503, %v511
        %v520 = vadd.f32 %v504, %v512
        %v521 = vadd.f32 %v505, %v513
        %v522 = vadd.f32 %v506, %v514
        %v523 = vadd.f32 %v507, %v515
        %v524 = vadd.f32 %v508, %v516
        %v525 = vrsqrt.pop %v517
        %v526 = vmul.f32 %v517, %v525
        %vm527 = vcmp.eq.f32.partialorder %v517, inf
        %v528 = vsel %vm527, %v517, %v526
        %vm529 = vcmp.eq.f32.partialorder %v517, 0.0
        %v530 = vand.u32 %v517, 2147483648
        %v531 = vsel %vm529, %v530, %v528
        %v532 = vrsqrt.pop %v518
        %v533 = vmul.f32 %v518, %v532
        %vm534 = vcmp.eq.f32.partialorder %v518, inf
        %v535 = vsel %vm534, %v518, %v533
        %vm536 = vcmp.eq.f32.partialorder %v518, 0.0
        %v537 = vand.u32 %v518, 2147483648
        %v538 = vsel %vm536, %v537, %v535
        %v539 = vrsqrt.pop %v519
        %v540 = vmul.f32 %v519, %v539
        %vm541 = vcmp.eq.f32.partialorder %v519, inf
        %v542 = vsel %vm541, %v519, %v540
        %vm543 = vcmp.eq.f32.partialorder %v519, 0.0
        %v544 = vand.u32 %v519, 2147483648
        %v545 = vsel %vm543, %v544, %v542
        %v546 = vrsqrt.pop %v520
        %v547 = vmul.f32 %v520, %v546
        %vm548 = vcmp.eq.f32.partialorder %v520, inf
        %v549 = vsel %vm548, %v520, %v547
        %vm550 = vcmp.eq.f32.partialorder %v520, 0.0
        %v551 = vand.u32 %v520, 2147483648
        %v552 = vsel %vm550, %v551, %v549
        %v553 = vrsqrt.pop %v521
        %v554 = vmul.f32 %v521, %v553
        %vm555 = vcmp.eq.f32.partialorder %v521, inf
        %v556 = vsel %vm555, %v521, %v554
        %vm557 = vcmp.eq.f32.partialorder %v521, 0.0
        %v558 = vand.u32 %v521, 2147483648
        %v559 = vsel %vm557, %v558, %v556
        %v560 = vrsqrt.pop %v522
        %v561 = vmul.f32 %v522, %v560
        %vm562 = vcmp.eq.f32.partialorder %v522, inf
        %v563 = vsel %vm562, %v522, %v561
        %vm564 = vcmp.eq.f32.partialorder %v522, 0.0
        %v565 = vand.u32 %v522, 2147483648
        %v566 = vsel %vm564, %v565, %v563
        %v567 = vrsqrt.pop %v523
        %v568 = vmul.f32 %v523, %v567
        %vm569 = vcmp.eq.f32.partialorder %v523, inf
        %v570 = vsel %vm569, %v523, %v568
        %vm571 = vcmp.eq.f32.partialorder %v523, 0.0
        %v572 = vand.u32 %v523, 2147483648
        %v573 = vsel %vm571, %v572, %v570
        %v574 = vrsqrt.pop %v524
        %v575 = vmul.f32 %v524, %v574
        %vm576 = vcmp.eq.f32.partialorder %v524, inf
        %v577 = vsel %vm576, %v524, %v575
        %vm578 = vcmp.eq.f32.partialorder %v524, 0.0
        %v579 = vand.u32 %v524, 2147483648
        %v580 = vsel %vm578, %v579, %v577
        %v581 = vmul.f32 %v531, 0.70710677
        %v582 = vmul.f32 %v538, 0.70710677
        %v583 = vmul.f32 %v545, 0.70710677
        %v584 = vmul.f32 %v552, 0.70710677
        %v585 = vmul.f32 %v559, 0.70710677
        %v586 = vmul.f32 %v566, 0.70710677
        %v587 = vmul.f32 %v573, 0.70710677
        %v588 = vmul.f32 %v580, 0.70710677
        %v589 = vmul.f32 %v493, 25.0
        %v590 = vmul.f32 %v494, 25.0
        %v591 = vmul.f32 %v495, 25.0
        %v592 = vmul.f32 %v496, 25.0
        %v593 = vmul.f32 %v497, 25.0
        %v594 = vmul.f32 %v498, 25.0
        %v595 = vmul.f32 %v499, 25.0
        %v596 = vmul.f32 %v500, 25.0
        %597 = vst [vmem:[%s150] sm:$0xff] %v589
        %598 = vst [vmem:[%s150 + $0x10] sm:$0xff] %v590
        %599 = vst [vmem:[%s150 + $0x20] sm:$0xff] %v591
        %600 = vst [vmem:[%s150 + $0x30] sm:$0xff] %v592
        %601 = vst [vmem:[%s150 + $0x40] sm:$0xff] %v593
        %602 = vst [vmem:[%s150 + $0x50] sm:$0xff] %v594
        %603 = vst [vmem:[%s150 + $0x60] sm:$0xff] %v595
        %604 = vst [vmem:[%s150 + $0x70] sm:$0xff] %v596
        %v605 = vmul.f32 %v581, 25.0
        %v606 = vmul.f32 %v582, 25.0
        %v607 = vmul.f32 %v583, 25.0
        %v608 = vmul.f32 %v584, 25.0
        %v609 = vmul.f32 %v585, 25.0
        %v610 = vmul.f32 %v586, 25.0
        %v611 = vmul.f32 %v587, 25.0
        %v612 = vmul.f32 %v588, 25.0
        %613 = vst [vmem:[%s150 + $0x8] sm:$0xff] %v605
        %614 = vst [vmem:[%s150 + $0x18] sm:$0xff] %v606
        %615 = vst [vmem:[%s150 + $0x28] sm:$0xff] %v607
        %616 = vst [vmem:[%s150 + $0x38] sm:$0xff] %v608
        %617 = vst [vmem:[%s150 + $0x48] sm:$0xff] %v609
        %618 = vst [vmem:[%s150 + $0x58] sm:$0xff] %v610
        %619 = vst [vmem:[%s150 + $0x68] sm:$0xff] %v611
        %620 = vst [vmem:[%s150 + $0x78] sm:$0xff] %v612
        %s621 = sand.u32 %s85, 1
        %s622 = scalar_lea.sflag [#allocation3], %s621
        %s623 = sand.u32 %s85, 1
        %s624 = smul.addr %s623, 128
        %s625 = scalar_lea.vmem [#allocation2], %s624
        // Predicated region
        $region29: #{vone_block_forward.1} parent=27 // pred_check
          %p626 = pneg %p95
        $region30: #{vone_block_forward.1} parent=27 // pred_check_branch
          %628 = sbr.rel (%p626) target = $region32
        $region31: #{vone_block_forward.1} parent=27 // pred_region
          %s629 = smul.u32 8, %s21
          %s631 = ssub.s32 2048, 2048
          %632 = vsyncadd %s622, %s631
          %s633 = smul.addr %s629, 2
          %s634 = smul.addr %s20, 16
          %s635 = sadd.s32 %s633, %s634
          %s636 = smul.addr %s635, 128
          %s637 = scalar_lea.hbm %s2, %s636
          %s638 = sshll.u32 %s625, 4
          %s639 = int_to_ptr.vmem [resolvable:$true] %s638
          %644 = dma.vmem_to_hbm [thread:$0]  %s639, 2048, %s637, %s622, 256, 256, 16
        $region32: #{vone_block_forward.1} parent=27 // pred_fallthru
          _
      $region28: #{vone_block_forward.1} parent=5 // pred_fallthru
        _
      %p645 = scmp.le.s32.totalorder 2, %s11
      // Predicated region
      $region33: #{vone_block_forward.1} parent=5 // pred_check
        %p646 = pneg %p645
      $region34: #{vone_block_forward.1} parent=5 // pred_check_branch
        %648 = sbr.rel (%p646) target = $region36
      $region35: #{vone_block_forward.1} parent=5 // pred_region
        %s649 = ssub.s32 %s11, 2
        // Predicated region
        $region37: #{vone_block_forward.1} parent=35 // pred_check
          %p650 = pneg %p101
        $region38: #{vone_block_forward.1} parent=35 // pred_check_branch
          %652 = sbr.rel (%p650) target = $region40
        $region39: #{vone_block_forward.1} parent=35 // pred_region
          %s653 = sand.u32 %s86, 1
          %s654 = scalar_lea.sflag [#allocation3], %s653
          %s655 = sand.u32 %s86, 1
          %s656 = smul.addr %s655, 128
          %s657 = scalar_lea.vmem [#allocation2], %s656
          %658 = dma.done %s654, 2048
        $region40: #{vone_block_forward.1} parent=35 // pred_fallthru
          _
      $region36: #{vone_block_forward.1} parent=5 // pred_fallthru
        _
    $region6: #{vone_block_forward.1} parent=1 // loop_footer
      %s15 = sadd.s32 1, %s11
    $region7: #{vone_block_forward.1} parent=1 // loop_footer_branch
      %10 = sbr.rel target = $region3
    $region8: #{vone_block_forward.1} parent=1 // loop_exit
      _
    %659 = vsyncpa [#allocation3], 1
    %s660 = scalar_lea.sflag [#allocation3], 1
    %661 = vsyncpa %s660, 1

// kernel: vone_block_forward.1
$region0: #{vone_block_forward.1}
  #allocation0 [shape = 'u32[]', space=smem, size = 0x4, offset = 0x4, fixed_abs, tag = 'smem constant byte address 0x4 - core index']
  #allocation1 [shape = 'u32[144,128]{1,0:T(1,128)}', space=vmem, size = 0x12000, scoped, tag = 'internal scratch']
  %s0 = inlined_call_operand.vmem [shape: f32[2,9,8,128], index: 0, kind: input, shape index: {}]
  %s1 = inlined_call_operand.vmem [shape: f32[256,384], index: 1, kind: input, shape index: {}]
  %s2 = inlined_call_operand.hbm [shape: f32[2,64,256], index: 2, kind: output, shape index: {}]
  %s3 = sld [smem:[#allocation0]]
  $region41: #{vone_block_forward.1} parent=0
    _
  %s5 = ssub.s32 1, %s3
  %s6 = scalar_select 0, %s5, %s3
  $region1: #{vone_block_forward.1} parent=0
    #allocation2 [shape = 'u8[131072]{0}', space=vmem, size = 0x20000, scoped, tag = 'output window, operand 0']
    #allocation3 [shape = 's32[2]{0}', space=sflag, size = 0x8, scoped, tag = 'scoped memory for vone_block_forward.1']
    %7 = vsyncpa [#allocation3], 0
    %s8 = scalar_lea.sflag [#allocation3], 1
    %9 = vsyncpa %s8, 0
    loop: start=0, step=1, limit=4
    $region2: #{vone_block_forward.1} parent=1 // loop_pre_header
      _
    $region3: #{vone_block_forward.1} parent=1 // loop_header
      %s11 = sphi 0, %s15
      %p12 = scmp.ge.s32.totalorder %s11, 4
      %s18 = sphi 0, %s30
      %s19 = sphi 0, %s26
      %s20 = sphi 0, %s18
      %s21 = sphi 0, %s19
      %s22 = sphi 0, %s20
      %s23 = sphi 0, %s21
      %s33 = sphi 0, %s35
      %s36 = sphi 0, %s33
      %s37 = sphi 0, %s36
      %s53 = sphi 0, %s37
      %s57 = sphi 0, %s57
      %s59 = sphi 0, %s57
      %s60 = sphi 0, %s59
      %s74 = sphi 0, %s60
      %s82 = sphi 0, %s84
      %s85 = sphi 0, %s82
      %s86 = sphi 0, %s85
      %s102 = sphi 0, %s86
    $region4: #{vone_block_forward.1} parent=1 // loop_header_branch
      %14 = sbr.rel (%p12) target = $region8
    $region5: #{vone_block_forward.1} parent=1 // loop_body
      %s16 = ssub.s32 %s11, 1
      %s17 = ssub.s32 %s11, 2
      %s24 = sadd.s32 1, %s19
      %p25 = scmp.ge.s32.totalorder %s24, 1
      %s26 = scalar_select %p25, 0, %s24
      %s27 = sadd.s32 1, %s18
      %s28 = scalar_select %p25, %s27, %s18
      %p29 = scmp.ge.s32.totalorder %s28, 2
      %s30 = scalar_select %p29, 0, %s28
      %s31 = ssub.s32 %s18, %s30
      %p32 = scmp.eq.s32.totalorder %s31, 0
      %s34 = sadd.s32 %s33, 1
      %s35 = scalar_select %p32, %s33, %s34
      %p38 = pneg %p32
      %p39 = scmp.eq.s32.totalorder %s11, 1
      %p40 = por %p38, %p39
      %p41 = scmp.ne.s32.totalorder %s33, %s36
      %p42 = scmp.eq.s32.totalorder %s11, 0
      %p43 = por %p41, %p42
      %p44 = scmp.ne.s32.totalorder %s33, %s36
      %p45 = scmp.eq.s32.totalorder %s16, 1
      %p46 = por %p44, %p45
      %p47 = scmp.ne.s32.totalorder %s36, %s37
      %p48 = scmp.eq.s32.totalorder %s16, 0
      %p49 = por %p47, %p48
      %p50 = scmp.ne.s32.totalorder %s36, %s37
      %p51 = scmp.eq.s32.totalorder %s17, 1
      %p52 = por %p50, %p51
      %p54 = scmp.ne.s32.totalorder %s37, %s53
      %p55 = scmp.eq.s32.totalorder %s17, 0
      %p56 = por %p54, %p55
      %s58 = sadd.s32 %s57, 1
      %p61 = scmp.eq.s32.totalorder %s11, 1
      %p62 = scmp.ne.s32.totalorder %s57, %s59
      %p63 = scmp.eq.s32.totalorder %s11, 0
      %p64 = por %p62, %p63
      %p65 = scmp.ne.s32.totalorder %s57, %s59
      %p66 = scmp.eq.s32.totalorder %s16, 1
      %p67 = por %p65, %p66
      %p68 = scmp.ne.s32.totalorder %s59, %s60
      %p69 = scmp.eq.s32.totalorder %s16, 0
      %p70 = por %p68, %p69
      %p71 = scmp.ne.s32.totalorder %s59, %s60
      %p72 = scmp.eq.s32.totalorder %s17, 1
      %p73 = por %p71, %p72
      %p75 = scmp.ne.s32.totalorder %s60, %s74
      %p76 = scmp.eq.s32.totalorder %s17, 0
      %p77 = por %p75, %p76
      %s78 = ssub.s32 %s18, %s30
      %s79 = ssub.s32 %s19, %s26
      %s80 = sor.u32 %s78, %s79
      %p81 = scmp.eq.s32.totalorder %s80, 0
      %s83 = sadd.s32 %s82, 1
      %s84 = scalar_select %p81, %s82, %s83
      %p87 = pneg %p81
      %p88 = scmp.eq.s32.totalorder %s11, 1
      %p89 = por %p87, %p88
      %p90 = scmp.ne.s32.totalorder %s82, %s85
      %p91 = scmp.eq.s32.totalorder %s11, 0
      %p92 = por %p90, %p91
      %p93 = scmp.ne.s32.totalorder %s82, %s85
      %p94 = scmp.eq.s32.totalorder %s16, 1
      %p95 = por %p93, %p94
      %p96 = scmp.ne.s32.totalorder %s85, %s86
      %p97 = scmp.eq.s32.totalorder %s16, 0
      %p98 = por %p96, %p97
      %p99 = scmp.ne.s32.totalorder %s85, %s86
      %p100 = scmp.eq.s32.totalorder %s17, 1
      %p101 = por %p99, %p100
      %p103 = scmp.ne.s32.totalorder %s86, %s102
      %p104 = scmp.eq.s32.totalorder %s17, 0
      %p105 = por %p103, %p104
      %p106 = scmp.le.s32.totalorder 1, %s11
      %p107 = scmp.lt.s32.totalorder %s11, 3
      %p108 = pnand %p106, %p107
      %p109 = pneg %p108
      // Predicated region
      $region9: #{vone_block_forward.1} parent=5 // pred_check
        _
      $region10: #{vone_block_forward.1} parent=5 // pred_check_branch
        %111 = sbr.rel (%p108) target = $region12
      $region11: #{vone_block_forward.1} parent=5 // pred_region
        %s112 = ssub.s32 %s11, 1
        // Predicated region
        $region13: #{vone_block_forward.1} parent=11 // pred_check
          %p113 = pneg %p70
        $region14: #{vone_block_forward.1} parent=11 // pred_check_branch
          %115 = sbr.rel (%p113) target = $region16
        $region15: #{vone_block_forward.1} parent=11 // pred_region
          _
        $region16: #{vone_block_forward.1} parent=11 // pred_fallthru
          _
      $region12: #{vone_block_forward.1} parent=5 // pred_fallthru
        _
      %p116 = scmp.lt.s32.totalorder %s11, 2
      // Predicated region
      $region17: #{vone_block_forward.1} parent=5 // pred_check
        %p117 = pneg %p116
      $region18: #{vone_block_forward.1} parent=5 // pred_check_branch
        %119 = sbr.rel (%p117) target = $region20
      $region19: #{vone_block_forward.1} parent=5 // pred_region
        // Predicated region
        $region21: #{vone_block_forward.1} parent=19 // pred_check
          %p120 = pneg %p43
        $region22: #{vone_block_forward.1} parent=19 // pred_check_branch
          %122 = sbr.rel (%p120) target = $region24
        $region23: #{vone_block_forward.1} parent=19 // pred_region
          %p123 = scmp.lt.s32.totalorder %s18, 1
          %s124 = scalar_select %p123, %s18, 1
          %s125 = smul.addr %s124, 9
          %s126 = smul.addr %s125, 8
          %s127 = scalar_lea.vmem %s0, %s126
        $region24: #{vone_block_forward.1} parent=19 // pred_fallthru
          _
      $region20: #{vone_block_forward.1} parent=5 // pred_fallthru
        _
      %p128 = scmp.le.s32.totalorder 1, %s11
      %p129 = scmp.lt.s32.totalorder %s11, 3
      %p130 = pnand %p128, %p129
      %p131 = pneg %p130
      // Predicated region
      $region25: #{vone_block_forward.1} parent=5 // pred_check
        _
      $region26: #{vone_block_forward.1} parent=5 // pred_check_branch
        %133 = sbr.rel (%p130) target = $region28
      $region27: #{vone_block_forward.1} parent=5 // pred_region
        %s134 = ssub.s32 %s11, 1
        %p135 = scmp.lt.s32.totalorder %s20, 1
        %s136 = scalar_select %p135, %s20, 1
        %s137 = smul.addr %s136, 9
        %s138 = smul.addr %s137, 8
        %s139 = scalar_lea.vmem %s0, %s138
        %p140 = pneg %p49
        %p141 = pneg %p46
        %p142 = pneg %p70
        %p143 = pneg %p67
        %p144 = pneg %p98
        %p145 = pneg %p95
        %s146 = sand.u32 %s85, 1
        %s147 = scalar_lea.sflag [#allocation3], %s146
        %s148 = sand.u32 %s85, 1
        %s149 = smul.addr %s148, 128
        %s150 = scalar_lea.vmem [#allocation2], %s149
        %p151 = scmp.lt.s32.totalorder %s20, 1
        %s152 = scalar_select %p151, %s20, 1
        %s153 = smul.addr %s152, 9
        %s154 = smul.addr %s153, 8
        %s155 = scalar_lea.vmem %s0, %s154
        %s156 = smul.u32 8, %s21
        %s157 = smul.u32 %s21, 8
        %s158 = smul.u32 %s157, 8
        %s159 = scalar_lea.vmem %s155, %s158
        %v160 = vld [vmem:[%s159] sm:$0xff]
        %v161 = vld [vmem:[%s159 + $0x8] sm:$0xff]
        %v162 = vld [vmem:[%s159 + $0x10] sm:$0xff]
        %v163 = vld [vmem:[%s159 + $0x18] sm:$0xff]
        %v164 = vld [vmem:[%s159 + $0x20] sm:$0xff]
        %v165 = vld [vmem:[%s159 + $0x28] sm:$0xff]
        %v166 = vld [vmem:[%s159 + $0x30] sm:$0xff]
        %v167 = vld [vmem:[%s159 + $0x38] sm:$0xff]
        %s168 = sadd.s32 %s157, 1
        %s169 = smul.u32 %s168, 8
        %s170 = scalar_lea.vmem %s155, %s169
        %v171 = vld [vmem:[%s170] sm:$0xff]
        %v172 = vld [vmem:[%s170 + $0x8] sm:$0xff]
        %v173 = vld [vmem:[%s170 + $0x10] sm:$0xff]
        %v174 = vld [vmem:[%s170 + $0x18] sm:$0xff]
        %v175 = vld [vmem:[%s170 + $0x20] sm:$0xff]
        %v176 = vld [vmem:[%s170 + $0x28] sm:$0xff]
        %v177 = vld [vmem:[%s170 + $0x30] sm:$0xff]
        %v178 = vld [vmem:[%s170 + $0x38] sm:$0xff]
        %v179 = vld [vmem:[%s1] sm:$0xff]
        %v180 = vld [vmem:[%s1 + $0x8] sm:$0xff]
        %v181 = vld [vmem:[%s1 + $0x10] sm:$0xff]
        %v182 = vld [vmem:[%s1 + $0x18] sm:$0xff]
        %v183 = vld [vmem:[%s1 + $0x20] sm:$0xff]
        %v184 = vld [vmem:[%s1 + $0x28] sm:$0xff]
        %v185 = vld [vmem:[%s1 + $0x30] sm:$0xff]
        %v186 = vld [vmem:[%s1 + $0x38] sm:$0xff]
        %v187 = vld [vmem:[%s1 + $0x40] sm:$0xff]
        %v188 = vld [vmem:[%s1 + $0x48] sm:$0xff]
        %v189 = vld [vmem:[%s1 + $0x50] sm:$0xff]
        %v190 = vld [vmem:[%s1 + $0x58] sm:$0xff]
        %v191 = vld [vmem:[%s1 + $0x60] sm:$0xff]
        %v192 = vld [vmem:[%s1 + $0x68] sm:$0xff]
        %v193 = vld [vmem:[%s1 + $0x70] sm:$0xff]
        %v194 = vld [vmem:[%s1 + $0x78] sm:$0xff]
        %v195 = vld [vmem:[%s1 + $0x80] sm:$0xff]
        %v196 = vld [vmem:[%s1 + $0x88] sm:$0xff]
        %v197 = vld [vmem:[%s1 + $0x90] sm:$0xff]
        %v198 = vld [vmem:[%s1 + $0x98] sm:$0xff]
        %v199 = vld [vmem:[%s1 + $0xa0] sm:$0xff]
        %v200 = vld [vmem:[%s1 + $0xa8] sm:$0xff]
        %v201 = vld [vmem:[%s1 + $0xb0] sm:$0xff]
        %v202 = vld [vmem:[%s1 + $0xb8] sm:$0xff]
        %v203 = vld [vmem:[%s1 + $0xc0] sm:$0xff]
        %v204 = vld [vmem:[%s1 + $0xc8] sm:$0xff]
        %v205 = vld [vmem:[%s1 + $0xd0] sm:$0xff]
        %v206 = vld [vmem:[%s1 + $0xd8] sm:$0xff]
        %v207 = vld [vmem:[%s1 + $0xe0] sm:$0xff]
        %v208 = vld [vmem:[%s1 + $0xe8] sm:$0xff]
        %v209 = vld [vmem:[%s1 + $0xf0] sm:$0xff]
        %v210 = vld [vmem:[%s1 + $0xf8] sm:$0xff]
        %v211 = vld [vmem:[%s1 + $0x100] sm:$0xff]
        %v212 = vld [vmem:[%s1 + $0x108] sm:$0xff]
        %v213 = vld [vmem:[%s1 + $0x110] sm:$0xff]
        %v214 = vld [vmem:[%s1 + $0x118] sm:$0xff]
        %v215 = vld [vmem:[%s1 + $0x120] sm:$0xff]
        %v216 = vld [vmem:[%s1 + $0x128] sm:$0xff]
        %v217 = vld [vmem:[%s1 + $0x130] sm:$0xff]
        %v218 = vld [vmem:[%s1 + $0x138] sm:$0xff]
        %v219 = vld [vmem:[%s1 + $0x140] sm:$0xff]
        %v220 = vld [vmem:[%s1 + $0x148] sm:$0xff]
        %v221 = vld [vmem:[%s1 + $0x150] sm:$0xff]
        %v222 = vld [vmem:[%s1 + $0x158] sm:$0xff]
        %v223 = vld [vmem:[%s1 + $0x160] sm:$0xff]
        %v224 = vld [vmem:[%s1 + $0x168] sm:$0xff]
        %v225 = vld [vmem:[%s1 + $0x170] sm:$0xff]
        %v226 = vld [vmem:[%s1 + $0x178] sm:$0xff]
        %v227 = vld [vmem:[%s1 + $0x180] sm:$0xff]
        %v228 = vld [vmem:[%s1 + $0x188] sm:$0xff]
        %v229 = vld [vmem:[%s1 + $0x190] sm:$0xff]
        %v230 = vld [vmem:[%s1 + $0x198] sm:$0xff]
        %v231 = vld [vmem:[%s1 + $0x1a0] sm:$0xff]
        %v232 = vld [vmem:[%s1 + $0x1a8] sm:$0xff]
        %v233 = vld [vmem:[%s1 + $0x1b0] sm:$0xff]
        %v234 = vld [vmem:[%s1 + $0x1b8] sm:$0xff]
        %v235 = vld [vmem:[%s1 + $0x1c0] sm:$0xff]
        %v236 = vld [vmem:[%s1 + $0x1c8] sm:$0xff]
        %v237 = vld [vmem:[%s1 + $0x1d0] sm:$0xff]
        %v238 = vld [vmem:[%s1 + $0x1d8] sm:$0xff]
        %v239 = vld [vmem:[%s1 + $0x1e0] sm:$0xff]
        %v240 = vld [vmem:[%s1 + $0x1e8] sm:$0xff]
        %v241 = vld [vmem:[%s1 + $0x1f0] sm:$0xff]
        %v242 = vld [vmem:[%s1 + $0x1f8] sm:$0xff]
        %v243 = vld [vmem:[%s1 + $0x200] sm:$0xff]
        %v244 = vld [vmem:[%s1 + $0x208] sm:$0xff]
        %v245 = vld [vmem:[%s1 + $0x210] sm:$0xff]
        %v246 = vld [vmem:[%s1 + $0x218] sm:$0xff]
        %v247 = vld [vmem:[%s1 + $0x220] sm:$0xff]
        %v248 = vld [vmem:[%s1 + $0x228] sm:$0xff]
        %v249 = vld [vmem:[%s1 + $0x230] sm:$0xff]
        %v250 = vld [vmem:[%s1 + $0x238] sm:$0xff]
        %v251 = vld [vmem:[%s1 + $0x240] sm:$0xff]
        %v252 = vld [vmem:[%s1 + $0x248] sm:$0xff]
        %v253 = vld [vmem:[%s1 + $0x250] sm:$0xff]
        %v254 = vld [vmem:[%s1 + $0x258] sm:$0xff]
        %v255 = vld [vmem:[%s1 + $0x260] sm:$0xff]
        %v256 = vld [vmem:[%s1 + $0x268] sm:$0xff]
        %v257 = vld [vmem:[%s1 + $0x270] sm:$0xff]
        %v258 = vld [vmem:[%s1 + $0x278] sm:$0xff]
        %v259 = vld [vmem:[%s1 + $0x280] sm:$0xff]
        %v260 = vld [vmem:[%s1 + $0x288] sm:$0xff]
        %v261 = vld [vmem:[%s1 + $0x290] sm:$0xff]
        %v262 = vld [vmem:[%s1 + $0x298] sm:$0xff]
        %v263 = vld [vmem:[%s1 + $0x2a0] sm:$0xff]
        %v264 = vld [vmem:[%s1 + $0x2a8] sm:$0xff]
        %v265 = vld [vmem:[%s1 + $0x2b0] sm:$0xff]
        %v266 = vld [vmem:[%s1 + $0x2b8] sm:$0xff]
        %v267 = vld [vmem:[%s1 + $0x2c0] sm:$0xff]
        %v268 = vld [vmem:[%s1 + $0x2c8] sm:$0xff]
        %v269 = vld [vmem:[%s1 + $0x2d0] sm:$0xff]
        %v270 = vld [vmem:[%s1 + $0x2d8] sm:$0xff]
        %v271 = vld [vmem:[%s1 + $0x2e0] sm:$0xff]
        %v272 = vld [vmem:[%s1 + $0x2e8] sm:$0xff]
        %v273 = vld [vmem:[%s1 + $0x2f0] sm:$0xff]
        %v274 = vld [vmem:[%s1 + $0x2f8] sm:$0xff]
        %275 = vmatprep.subr.mxu0 %v225
        %276 = vmatpush1.msra.mxu0 %v224
        %277 = vmatprep.subr.mxu0 %v222
        %278 = vmatpush1.msra.mxu0 %v221
        %279 = vmatprep.subr.mxu0 %v219
        %280 = vmatpush1.msra.mxu0 %v218
        %281 = vmatprep.subr.mxu0 %v216
        %282 = vmatpush1.msra.mxu0 %v215
        %283 = vmatprep.subr.mxu0 %v213
        %284 = vmatpush1.msra.mxu0 %v212
        %285 = vmatprep.subr.mxu0 %v210
        %286 = vmatpush1.msra.mxu0 %v209
        %287 = vmatprep.subr.mxu0 %v207
        %288 = vmatpush1.msra.mxu0 %v206
        %289 = vmatprep.subr.mxu0 %v204
        %290 = vmatpush1.msra.mxu0 %v203
        %291 = vmatprep.subr.mxu0 %v201
        %292 = vmatpush1.msra.mxu0 %v200
        %293 = vmatprep.subr.mxu0 %v198
        %294 = vmatpush1.msra.mxu0 %v197
        %295 = vmatprep.subr.mxu0 %v195
        %296 = vmatpush1.msra.mxu0 %v194
        %297 = vmatprep.subr.mxu0 %v192
        %298 = vmatpush1.msra.mxu0 %v191
        %299 = vmatprep.subr.mxu0 %v189
        %300 = vmatpush1.msra.mxu0 %v188
        %301 = vmatprep.subr.mxu0 %v186
        %302 = vmatpush1.msra.mxu0 %v185
        %303 = vmatprep.subr.mxu0 %v183
        %304 = vmatpush1.msra.mxu0 %v182
        %305 = vmatprep.subr.mxu0 %v180
        %306 = vmatpush1.msra.mxu0 %v179
        %307 = vmatprep.subr.mxu0 %v273
        %308 = vmatpush2.msra.mxu0 %v272
        %309 = vmatprep.subr.mxu0 %v270
        %310 = vmatpush2.msra.mxu0 %v269
        %311 = vmatprep.subr.mxu0 %v267
        %312 = vmatpush2.msra.mxu0 %v266
        %313 = vmatprep.subr.mxu0 %v264
        %314 = vmatpush2.msra.mxu0 %v263
        %315 = vmatprep.subr.mxu0 %v261
        %316 = vmatpush2.msra.mxu0 %v260
        %317 = vmatprep.subr.mxu0 %v258
        %318 = vmatpush2.msra.mxu0 %v257
        %319 = vmatprep.subr.mxu0 %v255
        %320 = vmatpush2.msra.mxu0 %v254
        %321 = vmatprep.subr.mxu0 %v252
        %322 = vmatpush2.msra.mxu0 %v251
        %323 = vmatprep.subr.mxu0 %v249
        %324 = vmatpush2.msra.mxu0 %v248
        %325 = vmatprep.subr.mxu0 %v246
        %326 = vmatpush2.msra.mxu0 %v245
        %327 = vmatprep.subr.mxu0 %v243
        %328 = vmatpush2.msra.mxu0 %v242
        %329 = vmatprep.subr.mxu0 %v240
        %330 = vmatpush2.msra.mxu0 %v239
        %331 = vmatprep.subr.mxu0 %v237
        %332 = vmatpush2.msra.mxu0 %v236
        %333 = vmatprep.subr.mxu0 %v234
        %334 = vmatpush2.msra.mxu0 %v233
        %335 = vmatprep.subr.mxu0 %v231
        %336 = vmatpush2.msra.mxu0 %v230
        %337 = vmatprep.subr.mxu0 %v228
        %338 = vmatpush2.msra.mxu0 %v227
        %339 = vmatprep.mubr.f32.mxu0 %v171
        %340 = vmatmul.mubr.f32.gmra.mxu0 %v160
        %v341 = vpop.f32.mrf.mxu0
        %v342 = vadd.f32 0.0, %v341
        %v343 = vpop.f32.mrf.mxu0
        %v344 = vadd.f32 0.0, %v343
        %345 = vmatprep.mubr.f32.mxu0 %v172
        %346 = vmatmul.mubr.f32.gmra.mxu0 %v161
        %v347 = vpop.f32.mrf.mxu0
        %v348 = vadd.f32 0.0, %v347
        %v349 = vpop.f32.mrf.mxu0
        %v350 = vadd.f32 0.0, %v349
        %351 = vmatprep.mubr.f32.mxu0 %v173
        %352 = vmatmul.mubr.f32.gmra.mxu0 %v162
        %v353 = vpop.f32.mrf.mxu0
        %v354 = vadd.f32 0.0, %v353
        %v355 = vpop.f32.mrf.mxu0
        %v356 = vadd.f32 0.0, %v355
        %357 = vmatprep.mubr.f32.mxu0 %v174
        %358 = vmatmul.mubr.f32.gmra.mxu0 %v163
        %v359 = vpop.f32.mrf.mxu0
        %v360 = vadd.f32 0.0, %v359
        %v361 = vpop.f32.mrf.mxu0
        %v362 = vadd.f32 0.0, %v361
        %363 = vmatprep.mubr.f32.mxu0 %v175
        %364 = vmatmul.mubr.f32.gmra.mxu0 %v164
        %v365 = vpop.f32.mrf.mxu0
        %v366 = vadd.f32 0.0, %v365
        %v367 = vpop.f32.mrf.mxu0
        %v368 = vadd.f32 0.0, %v367
        %369 = vmatprep.mubr.f32.mxu0 %v176
        %370 = vmatmul.mubr.f32.gmra.mxu0 %v165
        %v371 = vpop.f32.mrf.mxu0
        %v372 = vadd.f32 0.0, %v371
        %v373 = vpop.f32.mrf.mxu0
        %v374 = vadd.f32 0.0, %v373
        %375 = vmatprep.mubr.f32.mxu0 %v177
        %376 = vmatmul.mubr.f32.gmra.mxu0 %v166
        %v377 = vpop.f32.mrf.mxu0
        %v378 = vadd.f32 0.0, %v377
        %v379 = vpop.f32.mrf.mxu0
        %v380 = vadd.f32 0.0, %v379
        %381 = vmatprep.mubr.f32.mxu0 %v178
        %382 = vmatmul.mubr.f32.gmra.mxu0 %v167
        %v383 = vpop.f32.mrf.mxu0
        %v384 = vadd.f32 0.0, %v383
        %v385 = vpop.f32.mrf.mxu0
        %v386 = vadd.f32 0.0, %v385
        %387 = vdwg.mxu0
        %388 = vmatprep.subr.mxu0 0.0
        %389 = vmatpush1.msra.mxu0 %v226
        %390 = vmatprep.subr.mxu0 0.0
        %391 = vmatpush1.msra.mxu0 %v223
        %392 = vmatprep.subr.mxu0 0.0
        %393 = vmatpush1.msra.mxu0 %v220
        %394 = vmatprep.subr.mxu0 0.0
        %395 = vmatpush1.msra.mxu0 %v217
        %396 = vmatprep.subr.mxu0 0.0
        %397 = vmatpush1.msra.mxu0 %v214
        %398 = vmatprep.subr.mxu0 0.0
        %399 = vmatpush1.msra.mxu0 %v211
        %400 = vmatprep.subr.mxu0 0.0
        %401 = vmatpush1.msra.mxu0 %v208
        %402 = vmatprep.subr.mxu0 0.0
        %403 = vmatpush1.msra.mxu0 %v205
        %404 = vmatprep.subr.mxu0 0.0
        %405 = vmatpush1.msra.mxu0 %v202
        %406 = vmatprep.subr.mxu0 0.0
        %407 = vmatpush1.msra.mxu0 %v199
        %408 = vmatprep.subr.mxu0 0.0
        %409 = vmatpush1.msra.mxu0 %v196
        %410 = vmatprep.subr.mxu0 0.0
        %411 = vmatpush1.msra.mxu0 %v193
        %412 = vmatprep.subr.mxu0 0.0
        %413 = vmatpush1.msra.mxu0 %v190
        %414 = vmatprep.subr.mxu0 0.0
        %415 = vmatpush1.msra.mxu0 %v187
        %416 = vmatprep.subr.mxu0 0.0
        %417 = vmatpush1.msra.mxu0 %v184
        %418 = vmatprep.subr.mxu0 0.0
        %419 = vmatpush1.msra.mxu0 %v181
        %420 = vmatprep.subr.mxu0 0.0
        %421 = vmatpush2.msra.mxu0 %v274
        %422 = vmatprep.subr.mxu0 0.0
        %423 = vmatpush2.msra.mxu0 %v271
        %424 = vmatprep.subr.mxu0 0.0
        %425 = vmatpush2.msra.mxu0 %v268
        %426 = vmatprep.subr.mxu0 0.0
        %427 = vmatpush2.msra.mxu0 %v265
        %428 = vmatprep.subr.mxu0 0.0
        %429 = vmatpush2.msra.mxu0 %v262
        %430 = vmatprep.subr.mxu0 0.0
        %431 = vmatpush2.msra.mxu0 %v259
        %432 = vmatprep.subr.mxu0 0.0
        %433 = vmatpush2.msra.mxu0 %v256
        %434 = vmatprep.subr.mxu0 0.0
        %435 = vmatpush2.msra.mxu0 %v253
        %436 = vmatprep.subr.mxu0 0.0
        %437 = vmatpush2.msra.mxu0 %v250
        %438 = vmatprep.subr.mxu0 0.0
        %439 = vmatpush2.msra.mxu0 %v247
        %440 = vmatprep.subr.mxu0 0.0
        %441 = vmatpush2.msra.mxu0 %v244
        %442 = vmatprep.subr.mxu0 0.0
        %443 = vmatpush2.msra.mxu0 %v241
        %444 = vmatprep.subr.mxu0 0.0
        %445 = vmatpush2.msra.mxu0 %v238
        %446 = vmatprep.subr.mxu0 0.0
        %447 = vmatpush2.msra.mxu0 %v235
        %448 = vmatprep.subr.mxu0 0.0
        %449 = vmatpush2.msra.mxu0 %v232
        %450 = vmatprep.subr.mxu0 0.0
        %451 = vmatpush2.msra.mxu0 %v229
        %452 = vmatprep.mubr.f32.mxu0 %v171
        %453 = vmatmul.mubr.f32.gmra.mxu0 %v160
        %v454 = vpop.f32.mrf.mxu0
        %v455 = vadd.f32 0.0, %v454
        %v456 = vpop.f32.mrf.mxu0
        %457 = vmatprep.mubr.f32.mxu0 %v172
        %458 = vmatmul.mubr.f32.gmra.mxu0 %v161
        %v459 = vpop.f32.mrf.mxu0
        %v460 = vadd.f32 0.0, %v459
        %v461 = vpop.f32.mrf.mxu0
        %462 = vmatprep.mubr.f32.mxu0 %v173
        %463 = vmatmul.mubr.f32.gmra.mxu0 %v162
        %v464 = vpop.f32.mrf.mxu0
        %v465 = vadd.f32 0.0, %v464
        %v466 = vpop.f32.mrf.mxu0
        %467 = vmatprep.mubr.f32.mxu0 %v174
        %468 = vmatmul.mubr.f32.gmra.mxu0 %v163
        %v469 = vpop.f32.mrf.mxu0
        %v470 = vadd.f32 0.0, %v469
        %v471 = vpop.f32.mrf.mxu0
        %472 = vmatprep.mubr.f32.mxu0 %v175
        %473 = vmatmul.mubr.f32.gmra.mxu0 %v164
        %v474 = vpop.f32.mrf.mxu0
        %v475 = vadd.f32 0.0, %v474
        %v476 = vpop.f32.mrf.mxu0
        %477 = vmatprep.mubr.f32.mxu0 %v176
        %478 = vmatmul.mubr.f32.gmra.mxu0 %v165
        %v479 = vpop.f32.mrf.mxu0
        %v480 = vadd.f32 0.0, %v479
        %v481 = vpop.f32.mrf.mxu0
        %482 = vmatprep.mubr.f32.mxu0 %v177
        %483 = vmatmul.mubr.f32.gmra.mxu0 %v166
        %v484 = vpop.f32.mrf.mxu0
        %v485 = vadd.f32 0.0, %v484
        %v486 = vpop.f32.mrf.mxu0
        %487 = vmatprep.mubr.f32.mxu0 %v178
        %488 = vmatmul.mubr.f32.gmra.mxu0 %v167
        %v489 = vpop.f32.mrf.mxu0
        %v490 = vadd.f32 0.0, %v489
        %v491 = vpop.f32.mrf.mxu0
        %492 = vdwg.mxu0
        %v493 = vmax.f32 %v342, 0.0
        %v494 = vmax.f32 %v348, 0.0
        %v495 = vmax.f32 %v354, 0.0
        %v496 = vmax.f32 %v360, 0.0
        %v497 = vmax.f32 %v366, 0.0
        %v498 = vmax.f32 %v372, 0.0
        %v499 = vmax.f32 %v378, 0.0
        %v500 = vmax.f32 %v384, 0.0
        %v501 = vmul.f32 %v344, %v344
        %v502 = vmul.f32 %v350, %v350
        %v503 = vmul.f32 %v356, %v356
        %v504 = vmul.f32 %v362, %v362
        %v505 = vmul.f32 %v368, %v368
        %v506 = vmul.f32 %v374, %v374
        %v507 = vmul.f32 %v380, %v380
        %v508 = vmul.f32 %v386, %v386
        %v509 = vmul.f32 %v455, %v455
        %v510 = vmul.f32 %v460, %v460
        %v511 = vmul.f32 %v465, %v465
        %v512 = vmul.f32 %v470, %v470
        %v513 = vmul.f32 %v475, %v475
        %v514 = vmul.f32 %v480, %v480
        %v515 = vmul.f32 %v485, %v485
        %v516 = vmul.f32 %v490, %v490
        %v517 = vadd.f32 %v501, %v509
        %v518 = vadd.f32 %v502, %v510
        %v519 = vadd.f32 %v503, %v511
        %v520 = vadd.f32 %v504, %v512
        %v521 = vadd.f32 %v505, %v513
        %v522 = vadd.f32 %v506, %v514
        %v523 = vadd.f32 %v507, %v515
        %v524 = vadd.f32 %v508, %v516
        %v525 = vrsqrt.pop %v517
        %v526 = vmul.f32 %v517, %v525
        %vm527 = vcmp.eq.f32.partialorder %v517, inf
        %v528 = vsel %vm527, %v517, %v526
        %vm529 = vcmp.eq.f32.partialorder %v517, 0.0
        %v530 = vand.u32 %v517, 2147483648
        %v531 = vsel %vm529, %v530, %v528
        %v532 = vrsqrt.pop %v518
        %v533 = vmul.f32 %v518, %v532
        %vm534 = vcmp.eq.f32.partialorder %v518, inf
        %v535 = vsel %vm534, %v518, %v533
        %vm536 = vcmp.eq.f32.partialorder %v518, 0.0
        %v537 = vand.u32 %v518, 2147483648
        %v538 = vsel %vm536, %v537, %v535
        %v539 = vrsqrt.pop %v519
        %v540 = vmul.f32 %v519, %v539
        %vm541 = vcmp.eq.f32.partialorder %v519, inf
        %v542 = vsel %vm541, %v519, %v540
        %vm543 = vcmp.eq.f32.partialorder %v519, 0.0
        %v544 = vand.u32 %v519, 2147483648
        %v545 = vsel %vm543, %v544, %v542
        %v546 = vrsqrt.pop %v520
        %v547 = vmul.f32 %v520, %v546
        %vm548 = vcmp.eq.f32.partialorder %v520, inf
        %v549 = vsel %vm548, %v520, %v547
        %vm550 = vcmp.eq.f32.partialorder %v520, 0.0
        %v551 = vand.u32 %v520, 2147483648
        %v552 = vsel %vm550, %v551, %v549
        %v553 = vrsqrt.pop %v521
        %v554 = vmul.f32 %v521, %v553
        %vm555 = vcmp.eq.f32.partialorder %v521, inf
        %v556 = vsel %vm555, %v521, %v554
        %vm557 = vcmp.eq.f32.partialorder %v521, 0.0
        %v558 = vand.u32 %v521, 2147483648
        %v559 = vsel %vm557, %v558, %v556
        %v560 = vrsqrt.pop %v522
        %v561 = vmul.f32 %v522, %v560
        %vm562 = vcmp.eq.f32.partialorder %v522, inf
        %v563 = vsel %vm562, %v522, %v561
        %vm564 = vcmp.eq.f32.partialorder %v522, 0.0
        %v565 = vand.u32 %v522, 2147483648
        %v566 = vsel %vm564, %v565, %v563
        %v567 = vrsqrt.pop %v523
        %v568 = vmul.f32 %v523, %v567
        %vm569 = vcmp.eq.f32.partialorder %v523, inf
        %v570 = vsel %vm569, %v523, %v568
        %vm571 = vcmp.eq.f32.partialorder %v523, 0.0
        %v572 = vand.u32 %v523, 2147483648
        %v573 = vsel %vm571, %v572, %v570
        %v574 = vrsqrt.pop %v524
        %v575 = vmul.f32 %v524, %v574
        %vm576 = vcmp.eq.f32.partialorder %v524, inf
        %v577 = vsel %vm576, %v524, %v575
        %vm578 = vcmp.eq.f32.partialorder %v524, 0.0
        %v579 = vand.u32 %v524, 2147483648
        %v580 = vsel %vm578, %v579, %v577
        %v581 = vmul.f32 %v531, 0.70710677
        %v582 = vmul.f32 %v538, 0.70710677
        %v583 = vmul.f32 %v545, 0.70710677
        %v584 = vmul.f32 %v552, 0.70710677
        %v585 = vmul.f32 %v559, 0.70710677
        %v586 = vmul.f32 %v566, 0.70710677
        %v587 = vmul.f32 %v573, 0.70710677
        %v588 = vmul.f32 %v580, 0.70710677
        %v589 = vmul.f32 %v493, 25.0
        %v590 = vmul.f32 %v494, 25.0
        %v591 = vmul.f32 %v495, 25.0
        %v592 = vmul.f32 %v496, 25.0
        %v593 = vmul.f32 %v497, 25.0
        %v594 = vmul.f32 %v498, 25.0
        %v595 = vmul.f32 %v499, 25.0
        %v596 = vmul.f32 %v500, 25.0
        %597 = vst [vmem:[%s150] sm:$0xff] %v589
        %598 = vst [vmem:[%s150 + $0x10] sm:$0xff] %v590
        %599 = vst [vmem:[%s150 + $0x20] sm:$0xff] %v591
        %600 = vst [vmem:[%s150 + $0x30] sm:$0xff] %v592
        %601 = vst [vmem:[%s150 + $0x40] sm:$0xff] %v593
        %602 = vst [vmem:[%s150 + $0x50] sm:$0xff] %v594
        %603 = vst [vmem:[%s150 + $0x60] sm:$0xff] %v595
        %604 = vst [vmem:[%s150 + $0x70] sm:$0xff] %v596
        %v605 = vmul.f32 %v581, 25.0
        %v606 = vmul.f32 %v582, 25.0
        %v607 = vmul.f32 %v583, 25.0
        %v608 = vmul.f32 %v584, 25.0
        %v609 = vmul.f32 %v585, 25.0
        %v610 = vmul.f32 %v586, 25.0
        %v611 = vmul.f32 %v587, 25.0
        %v612 = vmul.f32 %v588, 25.0
        %613 = vst [vmem:[%s150 + $0x8] sm:$0xff] %v605
        %614 = vst [vmem:[%s150 + $0x18] sm:$0xff] %v606
        %615 = vst [vmem:[%s150 + $0x28] sm:$0xff] %v607
        %616 = vst [vmem:[%s150 + $0x38] sm:$0xff] %v608
        %617 = vst [vmem:[%s150 + $0x48] sm:$0xff] %v609
        %618 = vst [vmem:[%s150 + $0x58] sm:$0xff] %v610
        %619 = vst [vmem:[%s150 + $0x68] sm:$0xff] %v611
        %620 = vst [vmem:[%s150 + $0x78] sm:$0xff] %v612
        %s621 = sand.u32 %s85, 1
        %s622 = scalar_lea.sflag [#allocation3], %s621
        %s623 = sand.u32 %s85, 1
        %s624 = smul.addr %s623, 128
        %s625 = scalar_lea.vmem [#allocation2], %s624
        // Predicated region
        $region29: #{vone_block_forward.1} parent=27 // pred_check
          %p626 = pneg %p95
        $region30: #{vone_block_forward.1} parent=27 // pred_check_branch
          %628 = sbr.rel (%p626) target = $region32
        $region31: #{vone_block_forward.1} parent=27 // pred_region
          %s629 = smul.u32 8, %s21
          %s631 = ssub.s32 2048, 2048
          %632 = vsyncadd %s622, %s631
          %s633 = smul.addr %s629, 2
          %s634 = smul.addr %s20, 16
          %s635 = sadd.s32 %s633, %s634
          %s636 = smul.addr %s635, 128
          %s637 = scalar_lea.hbm %s2, %s636
          %s638 = sshll.u32 %s625, 4
          %s639 = int_to_ptr.vmem [resolvable:$true] %s638
          %644 = dma.vmem_to_hbm [thread:$0]  %s639, 2048, %s637, %s622, 256, 256, 16
        $region32: #{vone_block_forward.1} parent=27 // pred_fallthru
          _
      $region28: #{vone_block_forward.1} parent=5 // pred_fallthru
        _
      %p645 = scmp.le.s32.totalorder 2, %s11
      // Predicated region
      $region33: #{vone_block_forward.1} parent=5 // pred_check
        %p646 = pneg %p645
      $region34: #{vone_block_forward.1} parent=5 // pred_check_branch
        %648 = sbr.rel (%p646) target = $region36
      $region35: #{vone_block_forward.1} parent=5 // pred_region
        %s649 = ssub.s32 %s11, 2
        // Predicated region
        $region37: #{vone_block_forward.1} parent=35 // pred_check
          %p650 = pneg %p101
        $region38: #{vone_block_forward.1} parent=35 // pred_check_branch
          %652 = sbr.rel (%p650) target = $region40
        $region39: #{vone_block_forward.1} parent=35 // pred_region
          %s653 = sand.u32 %s86, 1
          %s654 = scalar_lea.sflag [#allocation3], %s653
          %s655 = sand.u32 %s86, 1
          %s656 = smul.addr %s655, 128
          %s657 = scalar_lea.vmem [#allocation2], %s656
          %658 = dma.done %s654, 2048
        $region40: #{vone_block_forward.1} parent=35 // pred_fallthru
          _
      $region36: #{vone_block_forward.1} parent=5 // pred_fallthru
        _
    $region6: #{vone_block_forward.1} parent=1 // loop_footer
      %s15 = sadd.s32 1, %s11
    $region7: #{vone_block_forward.1} parent=1 // loop_footer_branch
      %10 = sbr.rel target = $region3
    $region8: #{vone_block_forward.1} parent=1 // loop_exit
      _
    %659 = vsyncpa [#allocation3], 1
    %s660 = scalar_lea.sflag [#allocation3], 1
    %661 = vsyncpa %s660, 1

</llo_original>
